<compile_context>
chip_gen: v7x
topology: tpu7x:2x2x1
jax: 0.10.0
libtpu: 0.0.40
codegen_flags: <defaults>
</compile_context>

<pallas_src>
import math
import functools

import jax
import jax.numpy as jnp
from jax import lax
from jax.experimental import pallas as pl
from jax.experimental.pallas import tpu as pltpu

# ---------------- config (small, consistent with the module) ----------------
BATCH = 2
SEQ = 16
HIDDEN = 64
NUM_HEADS = 4
HEAD_DIM = HIDDEN // NUM_HEADS        # 16
NUM_KV_HEADS = 2
KV_GROUP = NUM_HEADS // NUM_KV_HEADS  # 2
INTERMEDIATE = 128
NUM_EXPERTS = 4
TOP_K = 2
RMS_EPS = 1e-6

Q_DIM = NUM_HEADS * HEAD_DIM          # 64
KV_DIM = NUM_KV_HEADS * HEAD_DIM      # 32
QKV_DIM = Q_DIM + 2 * KV_DIM          # 128  (lane-dense fused projection width)
EI = NUM_EXPERTS * INTERMEDIATE       # 512  (stacked expert width)

NEG_BIG = -1e30                       # large finite mask value (safe vs -inf)


# -------------------- Kernel 1: RMSNorm + fused QKV ---------------------------
def _norm_qkv_kernel(x_ref, ln_ref, wqkv_ref, qkv_ref):
    x = x_ref[...].astype(jnp.float32)
    var = jnp.mean(x * x, axis=-1, keepdims=True)
    xn = x * lax.rsqrt(var + RMS_EPS) * ln_ref[...]
    qkv_ref[...] = jnp.dot(
        xn, wqkv_ref[...], preferred_element_type=jnp.float32).astype(qkv_ref.dtype)


def fused_norm_qkv(x2d, ln_w, w_qkv, batch, seq):
    T, H = x2d.shape
    return pl.pallas_call(
        _norm_qkv_kernel,
        out_shape=jax.ShapeDtypeStruct((T, QKV_DIM), jnp.float32),
        grid=(batch,),
        in_specs=[
            pl.BlockSpec((seq, H), lambda b: (b, 0)),
            pl.BlockSpec((1, H), lambda b: (0, 0)),
            pl.BlockSpec((H, QKV_DIM), lambda b: (0, 0)),   # weight stays resident
        ],
        out_specs=pl.BlockSpec((seq, QKV_DIM), lambda b: (b, 0)),
        compiler_params=pltpu.CompilerParams(dimension_semantics=("parallel",)),
        cost_estimate=pl.CostEstimate(
            flops=2 * T * H * QKV_DIM,
            transcendentals=T,
            bytes_accessed=4 * (T * H + H * QKV_DIM + T * QKV_DIM)),
    )(x2d, ln_w.reshape(1, H), w_qkv)


# ---- Kernel 2: attention + out-proj + residual + pre-MoE norm + router -------
def _attn_norm_router_kernel(qkv_ref, wo_ref, resid_ref, ln2_ref, wr_ref,
                             hid_ref, xn_ref, logits_ref, *, seq, scale):
    S = seq
    q_all = qkv_ref[:, :Q_DIM].astype(jnp.float32)                    # (S, NH*D)
    k_all = qkv_ref[:, Q_DIM:Q_DIM + KV_DIM].astype(jnp.float32)      # (S, NKV*D)
    v_all = qkv_ref[:, Q_DIM + KV_DIM:].astype(jnp.float32)           # (S, NKV*D)

    row = lax.broadcasted_iota(jnp.int32, (S, S), 0)
    col = lax.broadcasted_iota(jnp.int32, (S, S), 1)
    causal = col <= row                                               # (S, S)
    causal_g = jnp.concatenate([causal] * KV_GROUP, axis=0)           # (G*S, S)

    # GQA: load K/V once per KV head; stack that KV head's query heads along rows
    # so each QK^T / PV is one (G*S, D) matmul instead of G tiny ones.
    head_outs = []
    for kv in range(NUM_KV_HEADS):
        q_parts = [
            q_all[:, (kv * KV_GROUP + g) * HEAD_DIM:
                     (kv * KV_GROUP + g + 1) * HEAD_DIM]
            for g in range(KV_GROUP)
        ]
        q2 = jnp.concatenate(q_parts, axis=0) * scale                 # (G*S, D)
        kh = k_all[:, kv * HEAD_DIM:(kv + 1) * HEAD_DIM]              # (S, D)
        vh = v_all[:, kv * HEAD_DIM:(kv + 1) * HEAD_DIM]              # (S, D)
        # contract last dims directly (no k.T transpose feeding the MXU)
        s = lax.dot_general(q2, kh, (((1,), (1,)), ((), ())),
                            preferred_element_type=jnp.float32)       # (G*S, S)
        s = jnp.where(causal_g, s, NEG_BIG)
        m = jnp.max(s, axis=-1, keepdims=True)
        p = jnp.exp(s - m)
        p = p * pl.reciprocal(jnp.sum(p, axis=-1, keepdims=True), approx=True)
        o2 = jnp.dot(p, vh, preferred_element_type=jnp.float32)       # (G*S, D)
        for g in range(KV_GROUP):
            head_outs.append(o2[g * S:(g + 1) * S, :])
    attn = jnp.concatenate(head_outs, axis=-1)                        # (S, NH*D)

    attn_out = jnp.dot(attn, wo_ref[...], preferred_element_type=jnp.float32)
    hidden = resid_ref[...].astype(jnp.float32) + attn_out            # residual add
    hid_ref[...] = hidden.astype(hid_ref.dtype)

    # pre-MoE RMSNorm + router projection fused here (no extra kernel launch)
    var = jnp.mean(hidden * hidden, axis=-1, keepdims=True)
    xn = hidden * lax.rsqrt(var + RMS_EPS) * ln2_ref[...]
    xn_ref[...] = xn.astype(xn_ref.dtype)
    logits_ref[...] = jnp.dot(
        xn, wr_ref[...], preferred_element_type=jnp.float32).astype(logits_ref.dtype)


def fused_attn_norm_router(qkv, wo, resid2d, ln2_w, w_router, batch, seq):
    T, H = resid2d.shape
    kernel = functools.partial(_attn_norm_router_kernel, seq=seq,
                               scale=1.0 / math.sqrt(HEAD_DIM))
    flops = (batch * NUM_HEADS * 4 * seq * seq * HEAD_DIM
             + 2 * T * Q_DIM * H + 2 * T * H * NUM_EXPERTS)
    return pl.pallas_call(
        kernel,
        out_shape=(jax.ShapeDtypeStruct((T, H), jnp.float32),
                   jax.ShapeDtypeStruct((T, H), jnp.float32),
                   jax.ShapeDtypeStruct((T, NUM_EXPERTS), jnp.float32)),
        grid=(batch,),
        in_specs=[
            pl.BlockSpec((seq, QKV_DIM), lambda b: (b, 0)),
            pl.BlockSpec((Q_DIM, H), lambda b: (0, 0)),
            pl.BlockSpec((seq, H), lambda b: (b, 0)),
            pl.BlockSpec((1, H), lambda b: (0, 0)),
            pl.BlockSpec((H, NUM_EXPERTS), lambda b: (0, 0)),
        ],
        out_specs=[pl.BlockSpec((seq, H), lambda b: (b, 0)),
                   pl.BlockSpec((seq, H), lambda b: (b, 0)),
                   pl.BlockSpec((seq, NUM_EXPERTS), lambda b: (b, 0))],
        compiler_params=pltpu.CompilerParams(dimension_semantics=("parallel",)),
        cost_estimate=pl.CostEstimate(
            flops=flops,
            transcendentals=batch * NUM_HEADS * seq * seq + T,
            bytes_accessed=4 * (T * QKV_DIM + Q_DIM * H + 3 * T * H
                                + H * NUM_EXPERTS + T * NUM_EXPERTS)),
    )(qkv, wo, resid2d, ln2_w.reshape(1, H), w_router)


# -------- Kernel 3: stacked-expert MoE + routed combine + residual ------------
def _moe_kernel(xn_ref, w_ref, wg_ref, wu_ref, wd_ref, resid_ref, out_ref):
    x = xn_ref[...].astype(jnp.float32)                               # (S, H)
    g = jnp.dot(x, wg_ref[...], preferred_element_type=jnp.float32)   # (S, E*I)
    u = jnp.dot(x, wu_ref[...], preferred_element_type=jnp.float32)   # (S, E*I)
    h = jax.nn.silu(g) * u                                            # (S, E*I)
    w = w_ref[...].astype(jnp.float32)                                # (S, E)
    # scale each expert's activation slab by its (possibly zero) routing weight,
    # then one stacked down-projection gives the routed sum directly.
    hw = jnp.concatenate(
        [h[:, e * INTERMEDIATE:(e + 1) * INTERMEDIATE] * w[:, e:e + 1]
         for e in range(NUM_EXPERTS)], axis=-1)                       # (S, E*I)
    moe = jnp.dot(hw, wd_ref[...], preferred_element_type=jnp.float32)  # (S, H)
    out_ref[...] = (resid_ref[...].astype(jnp.float32) + moe).astype(out_ref.dtype)


def fused_moe(xnorm2, w_full, wg_s, wu_s, wd_s, resid2d, batch, seq):
    T, H = xnorm2.shape
    flops = 2 * T * H * EI * 2 + 2 * T * EI * H
    return pl.pallas_call(
        _moe_kernel,
        out_shape=jax.ShapeDtypeStruct((T, H), jnp.float32),
        grid=(batch,),
        in_specs=[
            pl.BlockSpec((seq, H), lambda b: (b, 0)),
            pl.BlockSpec((seq, NUM_EXPERTS), lambda b: (b, 0)),
            pl.BlockSpec((H, EI), lambda b: (0, 0)),     # weights stay resident
            pl.BlockSpec((H, EI), lambda b: (0, 0)),
            pl.BlockSpec((EI, H), lambda b: (0, 0)),
            pl.BlockSpec((seq, H), lambda b: (b, 0)),
        ],
        out_specs=pl.BlockSpec((seq, H), lambda b: (b, 0)),
        compiler_params=pltpu.CompilerParams(dimension_semantics=("parallel",)),
        cost_estimate=pl.CostEstimate(
            flops=flops,
            transcendentals=T * EI,
            bytes_accessed=4 * (3 * T * H + T * NUM_EXPERTS + 3 * H * EI)),
    )(xnorm2, w_full, wg_s, wu_s, wd_s, resid2d)


# ------------------------------ params / forward ------------------------------
def init_params(key):
    ks = jax.random.split(key, 8)
    s = 0.02
    wq = jax.random.normal(ks[0], (HIDDEN, Q_DIM), jnp.float32) * s
    wk = jax.random.normal(ks[1], (HIDDEN, KV_DIM), jnp.float32) * s
    wv = jax.random.normal(ks[2], (HIDDEN, KV_DIM), jnp.float32) * s
    wg = jax.random.normal(ks[5], (NUM_EXPERTS, HIDDEN, INTERMEDIATE), jnp.float32) * s
    wu = jax.random.normal(ks[6], (NUM_EXPERTS, HIDDEN, INTERMEDIATE), jnp.float32) * s
    wd = jax.random.normal(ks[7], (NUM_EXPERTS, INTERMEDIATE, HIDDEN), jnp.float32) * s
    return {
        "ln1_w": jnp.ones((HIDDEN,), jnp.float32),
        "ln2_w": jnp.ones((HIDDEN,), jnp.float32),
        # fused QKV weight (columns = [q | k | v]); y = x @ W
        "w_qkv": jnp.concatenate([wq, wk, wv], axis=1),               # (H, 128)
        "wo": jax.random.normal(ks[3], (Q_DIM, HIDDEN), jnp.float32) * s,
        "w_router": jax.random.normal(ks[4], (HIDDEN, NUM_EXPERTS), jnp.float32) * s,
        # experts packed so each MoE projection is a single lane-dense MXU dot
        "wg_s": wg.transpose(1, 0, 2).reshape(HIDDEN, EI),            # (H, E*I)
        "wu_s": wu.transpose(1, 0, 2).reshape(HIDDEN, EI),            # (H, E*I)
        "wd_s": wd.reshape(EI, HIDDEN),                               # (E*I, H)
    }


def anemone_attention_decoder_layer(hidden_states, params):
    B, S, H = hidden_states.shape
    T = B * S
    x2d = hidden_states.reshape(T, H)          # residual (original input)

    # ---- input RMSNorm + fused QKV projection (one kernel) ----
    qkv = fused_norm_qkv(x2d, params["ln1_w"], params["w_qkv"], B, S)

    # ---- attention + out-proj + residual + pre-MoE norm + router (one kernel) ----
    hidden_attn, xnorm2, router_logits = fused_attn_norm_router(
        qkv, params["wo"], x2d, params["ln2_w"], params["w_router"], B, S)

    # ---- routing (Jamba-style: softmax -> top-k, no renormalization) ----
    # top_k has no clean single-kernel Pallas equivalent; XLA glue overlaps with
    # the surrounding custom calls thanks to the cost estimates.
    probs = jax.nn.softmax(router_logits.astype(jnp.float32), axis=-1)
    topk_vals, topk_idx = jax.lax.top_k(probs, TOP_K)
    w_full = jnp.sum(
        jax.nn.one_hot(topk_idx, NUM_EXPERTS, dtype=jnp.float32) * topk_vals[..., None],
        axis=1)                                                       # (T, E)

    # ---- stacked-expert MoE + routed combine + residual (one kernel) ----
    out2d = fused_moe(xnorm2, w_full, params["wg_s"], params["wu_s"],
                      params["wd_s"], hidden_attn, B, S)

    # TODO(synk): attn_router_loss from the Anemone attention router is not defined
    # by the provided module; returned as a constant 0.0 placeholder.
    attn_router_loss = jnp.float32(0.0)

    return out2d.reshape(B, S, H), router_logits, attn_router_loss


# --------------------------------- main --------------------------------------
if __name__ == "__main__":
    key = jax.random.PRNGKey(0)
    pkey, xkey = jax.random.split(key)
    params = init_params(pkey)
    hidden_states = jax.random.normal(xkey, (BATCH, SEQ, HIDDEN), jnp.float32)

    out, router_logits, attn_router_loss = jax.jit(
        anemone_attention_decoder_layer)(hidden_states, params)
    jax.block_until_ready(out)

    assert out.shape == (BATCH, SEQ, HIDDEN)
    assert router_logits.shape == (BATCH * SEQ, NUM_EXPERTS)
    print("KERNEL_OK")
</pallas_src>

<mosaic_0001>
module attributes {stable_mosaic.version = 11 : i64} {
  func.func @_attn_norm_router_kernel(%arg0: i32, %arg1: memref<16x128xf32, #tpu.memory_space<vmem>>, %arg2: memref<64x64xf32, #tpu.memory_space<vmem>>, %arg3: memref<16x64xf32, #tpu.memory_space<vmem>>, %arg4: memref<1x64xf32, #tpu.memory_space<vmem>>, %arg5: memref<64x4xf32, #tpu.memory_space<vmem>>, %arg6: memref<16x64xf32, #tpu.memory_space<vmem>>, %arg7: memref<16x64xf32, #tpu.memory_space<vmem>>, %arg8: memref<16x4xf32, #tpu.memory_space<vmem>>) attributes {dimension_semantics = [#tpu.dimension_semantics<parallel>], iteration_bounds = array<i64: 2>, scalar_prefetch = 0 : i64, scratch_operands = 0 : i64, tpu.core_type = #tpu.core_type<tc>, window_params = [{transform_indices = @transform_0, window_bounds = array<i64: 16, 128>}, {pipeline_mode = #tpu.pipeline_mode<synchronous>, transform_indices = @transform_1, window_bounds = array<i64: 64, 64>}, {transform_indices = @transform_2, window_bounds = array<i64: 16, 64>}, {pipeline_mode = #tpu.pipeline_mode<synchronous>, transform_indices = @transform_3, window_bounds = array<i64: 1, 64>}, {pipeline_mode = #tpu.pipeline_mode<synchronous>, transform_indices = @transform_4, window_bounds = array<i64: 64, 4>}, {transform_indices = @transform_5, window_bounds = array<i64: 16, 64>}, {transform_indices = @transform_6, window_bounds = array<i64: 16, 64>}, {transform_indices = @transform_7, window_bounds = array<i64: 16, 4>}]} {
    %c0 = arith.constant 0 : index
    %c0_0 = arith.constant 0 : index
    %0 = vector.load %arg1[%c0, %c0_0] : memref<16x128xf32, #tpu.memory_space<vmem>>, vector<16x64xf32>
    %c0_1 = arith.constant 0 : index
    %c64 = arith.constant 64 : index
    %1 = vector.load %arg1[%c0_1, %c64] : memref<16x128xf32, #tpu.memory_space<vmem>>, vector<16x32xf32>
    %c0_2 = arith.constant 0 : index
    %c96 = arith.constant 96 : index
    %2 = vector.load %arg1[%c0_2, %c96] : memref<16x128xf32, #tpu.memory_space<vmem>>, vector<16x32xf32>
    %3 = tpu.iota {dimensions = array<i32: 0>} : vector<16x16xi32>
    %4 = tpu.iota {dimensions = array<i32: 1>} : vector<16x16xi32>
    %5 = arith.cmpi sle, %4, %3 : vector<16x16xi32>
    %6 = tpu.concatenate %5, %5 in 0 : vector<16x16xi1>, vector<16x16xi1> -> vector<32x16xi1>
    %7 = vector.extract_strided_slice %0 {offsets = [0, 0], sizes = [16, 16], strides = [1, 1]} : vector<16x64xf32> to vector<16x16xf32>
    %8 = vector.extract_strided_slice %0 {offsets = [0, 16], sizes = [16, 16], strides = [1, 1]} : vector<16x64xf32> to vector<16x16xf32>
    %9 = tpu.concatenate %7, %8 in 0 : vector<16x16xf32>, vector<16x16xf32> -> vector<32x16xf32>
    %cst = arith.constant 2.500000e-01 : f32
    %10 = vector.broadcast %cst : f32 to vector<32x16xf32>
    %11 = arith.mulf %9, %10 : vector<32x16xf32>
    %12 = vector.extract_strided_slice %1 {offsets = [0, 0], sizes = [16, 16], strides = [1, 1]} : vector<16x32xf32> to vector<16x16xf32>
    %13 = vector.extract_strided_slice %2 {offsets = [0, 0], sizes = [16, 16], strides = [1, 1]} : vector<16x32xf32> to vector<16x16xf32>
    %cst_3 = arith.constant dense<0.000000e+00> : vector<32x16xf32>
    %14 = tpu.matmul %11, %12, %cst_3 {dimension_numbers = #tpu.dot_dimension_numbers<[1], [1], [0], [0], [0, 0, 1, 0], [], []>} : vector<32x16xf32>, vector<16x16xf32>, vector<32x16xf32> -> vector<32x16xf32>
    %cst_4 = arith.constant -1.000000e+30 : f32
    %15 = vector.broadcast %cst_4 : f32 to vector<32x16xf32>
    %16 = arith.select %6, %14, %15 : vector<32x16xi1>, vector<32x16xf32>
    %cst_5 = arith.constant dense<0xFF800000> : vector<32xf32>
    %17 = vector.multi_reduction <maximumf>, %16, %cst_5 [1] : vector<32x16xf32> to vector<32xf32>
    %18 = vector.shape_cast %17 : vector<32xf32> to vector<32x1xf32>
    %19 = vector.broadcast %18 : vector<32x1xf32> to vector<32x16xf32>
    %20 = arith.subf %16, %19 : vector<32x16xf32>
    %21 = math.exp %20 : vector<32x16xf32>
    %cst_6 = arith.constant dense<0.000000e+00> : vector<32xf32>
    %22 = vector.multi_reduction <add>, %21, %cst_6 [1] : vector<32x16xf32> to vector<32xf32>
    %23 = vector.shape_cast %22 : vector<32xf32> to vector<32x1xf32>
    %24 = tpu.reciprocal %23 {approx = true} : vector<32x1xf32> -> vector<32x1xf32>
    %25 = vector.broadcast %24 : vector<32x1xf32> to vector<32x16xf32>
    %26 = arith.mulf %21, %25 : vector<32x16xf32>
    %cst_7 = arith.constant dense<0.000000e+00> : vector<32x16xf32>
    %27 = tpu.matmul %26, %13, %cst_7 {dimension_numbers = #tpu.dot_dimension_numbers<[1], [0], [0], [1], [0, 0, 1, 1], [], []>} : vector<32x16xf32>, vector<16x16xf32>, vector<32x16xf32> -> vector<32x16xf32>
    %28 = vector.extract_strided_slice %27 {offsets = [0, 0], sizes = [16, 16], strides = [1, 1]} : vector<32x16xf32> to vector<16x16xf32>
    %29 = vector.extract_strided_slice %27 {offsets = [16, 0], sizes = [16, 16], strides = [1, 1]} : vector<32x16xf32> to vector<16x16xf32>
    %30 = vector.extract_strided_slice %0 {offsets = [0, 32], sizes = [16, 16], strides = [1, 1]} : vector<16x64xf32> to vector<16x16xf32>
    %31 = vector.extract_strided_slice %0 {offsets = [0, 48], sizes = [16, 16], strides = [1, 1]} : vector<16x64xf32> to vector<16x16xf32>
    %32 = tpu.concatenate %30, %31 in 0 : vector<16x16xf32>, vector<16x16xf32> -> vector<32x16xf32>
    %cst_8 = arith.constant 2.500000e-01 : f32
    %33 = vector.broadcast %cst_8 : f32 to vector<32x16xf32>
    %34 = arith.mulf %32, %33 : vector<32x16xf32>
    %35 = vector.extract_strided_slice %1 {offsets = [0, 16], sizes = [16, 16], strides = [1, 1]} : vector<16x32xf32> to vector<16x16xf32>
    %36 = vector.extract_strided_slice %2 {offsets = [0, 16], sizes = [16, 16], strides = [1, 1]} : vector<16x32xf32> to vector<16x16xf32>
    %cst_9 = arith.constant dense<0.000000e+00> : vector<32x16xf32>
    %37 = tpu.matmul %34, %35, %cst_9 {dimension_numbers = #tpu.dot_dimension_numbers<[1], [1], [0], [0], [0, 0, 1, 0], [], []>} : vector<32x16xf32>, vector<16x16xf32>, vector<32x16xf32> -> vector<32x16xf32>
    %cst_10 = arith.constant -1.000000e+30 : f32
    %38 = vector.broadcast %cst_10 : f32 to vector<32x16xf32>
    %39 = arith.select %6, %37, %38 : vector<32x16xi1>, vector<32x16xf32>
    %cst_11 = arith.constant dense<0xFF800000> : vector<32xf32>
    %40 = vector.multi_reduction <maximumf>, %39, %cst_11 [1] : vector<32x16xf32> to vector<32xf32>
    %41 = vector.shape_cast %40 : vector<32xf32> to vector<32x1xf32>
    %42 = vector.broadcast %41 : vector<32x1xf32> to vector<32x16xf32>
    %43 = arith.subf %39, %42 : vector<32x16xf32>
    %44 = math.exp %43 : vector<32x16xf32>
    %cst_12 = arith.constant dense<0.000000e+00> : vector<32xf32>
    %45 = vector.multi_reduction <add>, %44, %cst_12 [1] : vector<32x16xf32> to vector<32xf32>
    %46 = vector.shape_cast %45 : vector<32xf32> to vector<32x1xf32>
    %47 = tpu.reciprocal %46 {approx = true} : vector<32x1xf32> -> vector<32x1xf32>
    %48 = vector.broadcast %47 : vector<32x1xf32> to vector<32x16xf32>
    %49 = arith.mulf %44, %48 : vector<32x16xf32>
    %cst_13 = arith.constant dense<0.000000e+00> : vector<32x16xf32>
    %50 = tpu.matmul %49, %36, %cst_13 {dimension_numbers = #tpu.dot_dimension_numbers<[1], [0], [0], [1], [0, 0, 1, 1], [], []>} : vector<32x16xf32>, vector<16x16xf32>, vector<32x16xf32> -> vector<32x16xf32>
    %51 = vector.extract_strided_slice %50 {offsets = [0, 0], sizes = [16, 16], strides = [1, 1]} : vector<32x16xf32> to vector<16x16xf32>
    %52 = vector.extract_strided_slice %50 {offsets = [16, 0], sizes = [16, 16], strides = [1, 1]} : vector<32x16xf32> to vector<16x16xf32>
    %53 = tpu.concatenate %28, %29, %51, %52 in 1 : vector<16x16xf32>, vector<16x16xf32>, vector<16x16xf32>, vector<16x16xf32> -> vector<16x64xf32>
    %c0_14 = arith.constant 0 : index
    %c0_15 = arith.constant 0 : index
    %54 = vector.load %arg2[%c0_14, %c0_15] : memref<64x64xf32, #tpu.memory_space<vmem>>, vector<64x64xf32>
    %cst_16 = arith.constant dense<0.000000e+00> : vector<16x64xf32>
    %55 = tpu.matmul %53, %54, %cst_16 {dimension_numbers = #tpu.dot_dimension_numbers<[1], [0], [0], [1], [0, 0, 1, 1], [], []>} : vector<16x64xf32>, vector<64x64xf32>, vector<16x64xf32> -> vector<16x64xf32>
    %c0_17 = arith.constant 0 : index
    %c0_18 = arith.constant 0 : index
    %56 = vector.load %arg3[%c0_17, %c0_18] : memref<16x64xf32, #tpu.memory_space<vmem>>, vector<16x64xf32>
    %57 = arith.addf %56, %55 : vector<16x64xf32>
    %c0_19 = arith.constant 0 : index
    %c0_20 = arith.constant 0 : index
    %58 = vector.load %arg6[%c0_19, %c0_20] : memref<16x64xf32, #tpu.memory_space<vmem>>, vector<16x64xf32>
    tpu.vector_store %arg6[%c0_19, %c0_20], %57 {strides = array<i32>} : memref<16x64xf32, #tpu.memory_space<vmem>>, vector<16x64xf32>,
    %59 = arith.mulf %57, %57 : vector<16x64xf32>
    %cst_21 = arith.constant dense<0.000000e+00> : vector<16xf32>
    %60 = vector.multi_reduction <add>, %59, %cst_21 [1] : vector<16x64xf32> to vector<16xf32>
    %61 = vector.shape_cast %60 : vector<16xf32> to vector<16x1xf32>
    %cst_22 = arith.constant 6.400000e+01 : f32
    %62 = vector.broadcast %cst_22 : f32 to vector<16x1xf32>
    %63 = arith.divf %61, %62 : vector<16x1xf32>
    %cst_23 = arith.constant 9.99999997E-7 : f32
    %64 = vector.broadcast %cst_23 : f32 to vector<16x1xf32>
    %65 = arith.addf %63, %64 : vector<16x1xf32>
    %66 = math.rsqrt %65 : vector<16x1xf32>
    %67 = vector.broadcast %66 : vector<16x1xf32> to vector<16x64xf32>
    %68 = arith.mulf %57, %67 : vector<16x64xf32>
    %c0_24 = arith.constant 0 : index
    %c0_25 = arith.constant 0 : index
    %69 = vector.load %arg4[%c0_24, %c0_25] : memref<1x64xf32, #tpu.memory_space<vmem>>, vector<1x64xf32>
    %70 = vector.broadcast %69 : vector<1x64xf32> to vector<16x64xf32>
    %71 = arith.mulf %68, %70 : vector<16x64xf32>
    %c0_26 = arith.constant 0 : index
    %c0_27 = arith.constant 0 : index
    %72 = vector.load %arg7[%c0_26, %c0_27] : memref<16x64xf32, #tpu.memory_space<vmem>>, vector<16x64xf32>
    tpu.vector_store %arg7[%c0_26, %c0_27], %71 {strides = array<i32>} : memref<16x64xf32, #tpu.memory_space<vmem>>, vector<16x64xf32>,
    %c0_28 = arith.constant 0 : index
    %c0_29 = arith.constant 0 : index
    %73 = vector.load %arg5[%c0_28, %c0_29] : memref<64x4xf32, #tpu.memory_space<vmem>>, vector<64x4xf32>
    %cst_30 = arith.constant dense<0.000000e+00> : vector<16x4xf32>
    %74 = tpu.matmul %71, %73, %cst_30 {dimension_numbers = #tpu.dot_dimension_numbers<[1], [0], [0], [1], [0, 0, 1, 1], [], []>} : vector<16x64xf32>, vector<64x4xf32>, vector<16x4xf32> -> vector<16x4xf32>
    %c0_31 = arith.constant 0 : index
    %c0_32 = arith.constant 0 : index
    %75 = vector.load %arg8[%c0_31, %c0_32] : memref<16x4xf32, #tpu.memory_space<vmem>>, vector<16x4xf32>
    tpu.vector_store %arg8[%c0_31, %c0_32], %74 {strides = array<i32>} : memref<16x4xf32, #tpu.memory_space<vmem>>, vector<16x4xf32>,
    return
  }
  func.func @transform_0(%arg0: i32) -> (i32, i32) {
    %c0_i32 = arith.constant 0 : i32
    %c0_i32_0 = arith.constant 0 : i32
    return %arg0, %c0_i32 : i32, i32
  }
  func.func @transform_1(%arg0: i32) -> (i32, i32) {
    %c0_i32 = arith.constant 0 : i32
    %c0_i32_0 = arith.constant 0 : i32
    %c0_i32_1 = arith.constant 0 : i32
    return %c0_i32, %c0_i32_0 : i32, i32
  }
  func.func @transform_2(%arg0: i32) -> (i32, i32) {
    %c0_i32 = arith.constant 0 : i32
    %c0_i32_0 = arith.constant 0 : i32
    return %arg0, %c0_i32 : i32, i32
  }
  func.func @transform_3(%arg0: i32) -> (i32, i32) {
    %c0_i32 = arith.constant 0 : i32
    %c0_i32_0 = arith.constant 0 : i32
    %c0_i32_1 = arith.constant 0 : i32
    return %c0_i32, %c0_i32_0 : i32, i32
  }
  func.func @transform_4(%arg0: i32) -> (i32, i32) {
    %c0_i32 = arith.constant 0 : i32
    %c0_i32_0 = arith.constant 0 : i32
    %c0_i32_1 = arith.constant 0 : i32
    return %c0_i32, %c0_i32_0 : i32, i32
  }
  func.func @transform_5(%arg0: i32) -> (i32, i32) {
    %c0_i32 = arith.constant 0 : i32
    %c0_i32_0 = arith.constant 0 : i32
    return %arg0, %c0_i32 : i32, i32
  }
  func.func @transform_6(%arg0: i32) -> (i32, i32) {
    %c0_i32 = arith.constant 0 : i32
    %c0_i32_0 = arith.constant 0 : i32
    return %arg0, %c0_i32 : i32, i32
  }
  func.func @transform_7(%arg0: i32) -> (i32, i32) {
    %c0_i32 = arith.constant 0 : i32
    %c0_i32_0 = arith.constant 0 : i32
    return %arg0, %c0_i32 : i32, i32
  }
}

module attributes {stable_mosaic.version = 11 : i64} {
  func.func @_norm_qkv_kernel(%arg0: i32, %arg1: memref<16x64xf32, #tpu.memory_space<vmem>>, %arg2: memref<1x64xf32, #tpu.memory_space<vmem>>, %arg3: memref<64x128xf32, #tpu.memory_space<vmem>>, %arg4: memref<16x128xf32, #tpu.memory_space<vmem>>) attributes {dimension_semantics = [#tpu.dimension_semantics<parallel>], iteration_bounds = array<i64: 2>, scalar_prefetch = 0 : i64, scratch_operands = 0 : i64, tpu.core_type = #tpu.core_type<tc>, window_params = [{transform_indices = @transform_0, window_bounds = array<i64: 16, 64>}, {pipeline_mode = #tpu.pipeline_mode<synchronous>, transform_indices = @transform_1, window_bounds = array<i64: 1, 64>}, {pipeline_mode = #tpu.pipeline_mode<synchronous>, transform_indices = @transform_2, window_bounds = array<i64: 64, 128>}, {transform_indices = @transform_3, window_bounds = array<i64: 16, 128>}]} {
    %c0 = arith.constant 0 : index
    %c0_0 = arith.constant 0 : index
    %0 = vector.load %arg1[%c0, %c0_0] : memref<16x64xf32, #tpu.memory_space<vmem>>, vector<16x64xf32>
    %1 = arith.mulf %0, %0 : vector<16x64xf32>
    %cst = arith.constant dense<0.000000e+00> : vector<16xf32>
    %2 = vector.multi_reduction <add>, %1, %cst [1] : vector<16x64xf32> to vector<16xf32>
    %3 = vector.shape_cast %2 : vector<16xf32> to vector<16x1xf32>
    %cst_1 = arith.constant 6.400000e+01 : f32
    %4 = vector.broadcast %cst_1 : f32 to vector<16x1xf32>
    %5 = arith.divf %3, %4 : vector<16x1xf32>
    %cst_2 = arith.constant 9.99999997E-7 : f32
    %6 = vector.broadcast %cst_2 : f32 to vector<16x1xf32>
    %7 = arith.addf %5, %6 : vector<16x1xf32>
    %8 = math.rsqrt %7 : vector<16x1xf32>
    %9 = vector.broadcast %8 : vector<16x1xf32> to vector<16x64xf32>
    %10 = arith.mulf %0, %9 : vector<16x64xf32>
    %c0_3 = arith.constant 0 : index
    %c0_4 = arith.constant 0 : index
    %11 = vector.load %arg2[%c0_3, %c0_4] : memref<1x64xf32, #tpu.memory_space<vmem>>, vector<1x64xf32>
    %12 = vector.broadcast %11 : vector<1x64xf32> to vector<16x64xf32>
    %13 = arith.mulf %10, %12 : vector<16x64xf32>
    %c0_5 = arith.constant 0 : index
    %c0_6 = arith.constant 0 : index
    %14 = vector.load %arg3[%c0_5, %c0_6] : memref<64x128xf32, #tpu.memory_space<vmem>>, vector<64x128xf32>
    %cst_7 = arith.constant dense<0.000000e+00> : vector<16x128xf32>
    %15 = tpu.matmul %13, %14, %cst_7 {dimension_numbers = #tpu.dot_dimension_numbers<[1], [0], [0], [1], [0, 0, 1, 1], [], []>} : vector<16x64xf32>, vector<64x128xf32>, vector<16x128xf32> -> vector<16x128xf32>
    %c0_8 = arith.constant 0 : index
    %c0_9 = arith.constant 0 : index
    %16 = vector.load %arg4[%c0_8, %c0_9] : memref<16x128xf32, #tpu.memory_space<vmem>>, vector<16x128xf32>
    tpu.vector_store %arg4[%c0_8, %c0_9], %15 {strides = array<i32>} : memref<16x128xf32, #tpu.memory_space<vmem>>, vector<16x128xf32>,
    return
  }
  func.func @transform_0(%arg0: i32) -> (i32, i32) {
    %c0_i32 = arith.constant 0 : i32
    %c0_i32_0 = arith.constant 0 : i32
    return %arg0, %c0_i32 : i32, i32
  }
  func.func @transform_1(%arg0: i32) -> (i32, i32) {
    %c0_i32 = arith.constant 0 : i32
    %c0_i32_0 = arith.constant 0 : i32
    %c0_i32_1 = arith.constant 0 : i32
    return %c0_i32, %c0_i32_0 : i32, i32
  }
  func.func @transform_2(%arg0: i32) -> (i32, i32) {
    %c0_i32 = arith.constant 0 : i32
    %c0_i32_0 = arith.constant 0 : i32
    %c0_i32_1 = arith.constant 0 : i32
    return %c0_i32, %c0_i32_0 : i32, i32
  }
  func.func @transform_3(%arg0: i32) -> (i32, i32) {
    %c0_i32 = arith.constant 0 : i32
    %c0_i32_0 = arith.constant 0 : i32
    return %arg0, %c0_i32 : i32, i32
  }
}

module attributes {stable_mosaic.version = 11 : i64} {
  func.func @_moe_kernel(%arg0: i32, %arg1: memref<16x64xf32, #tpu.memory_space<vmem>>, %arg2: memref<16x4xf32, #tpu.memory_space<vmem>>, %arg3: memref<64x512xf32, #tpu.memory_space<vmem>>, %arg4: memref<64x512xf32, #tpu.memory_space<vmem>>, %arg5: memref<512x64xf32, #tpu.memory_space<vmem>>, %arg6: memref<16x64xf32, #tpu.memory_space<vmem>>, %arg7: memref<16x64xf32, #tpu.memory_space<vmem>>) attributes {dimension_semantics = [#tpu.dimension_semantics<parallel>], iteration_bounds = array<i64: 2>, scalar_prefetch = 0 : i64, scratch_operands = 0 : i64, tpu.core_type = #tpu.core_type<tc>, window_params = [{transform_indices = @transform_0, window_bounds = array<i64: 16, 64>}, {transform_indices = @transform_1, window_bounds = array<i64: 16, 4>}, {pipeline_mode = #tpu.pipeline_mode<synchronous>, transform_indices = @transform_2, window_bounds = array<i64: 64, 512>}, {pipeline_mode = #tpu.pipeline_mode<synchronous>, transform_indices = @transform_3, window_bounds = array<i64: 64, 512>}, {pipeline_mode = #tpu.pipeline_mode<synchronous>, transform_indices = @transform_4, window_bounds = array<i64: 512, 64>}, {transform_indices = @transform_5, window_bounds = array<i64: 16, 64>}, {transform_indices = @transform_6, window_bounds = array<i64: 16, 64>}]} {
    %c0 = arith.constant 0 : index
    %c0_0 = arith.constant 0 : index
    %0 = vector.load %arg1[%c0, %c0_0] : memref<16x64xf32, #tpu.memory_space<vmem>>, vector<16x64xf32>
    %c0_1 = arith.constant 0 : index
    %c0_2 = arith.constant 0 : index
    %1 = vector.load %arg3[%c0_1, %c0_2] : memref<64x512xf32, #tpu.memory_space<vmem>>, vector<64x512xf32>
    %cst = arith.constant dense<0.000000e+00> : vector<16x512xf32>
    %2 = tpu.matmul %0, %1, %cst {dimension_numbers = #tpu.dot_dimension_numbers<[1], [0], [0], [1], [0, 0, 1, 1], [], []>} : vector<16x64xf32>, vector<64x512xf32>, vector<16x512xf32> -> vector<16x512xf32>
    %c0_3 = arith.constant 0 : index
    %c0_4 = arith.constant 0 : index
    %3 = vector.load %arg4[%c0_3, %c0_4] : memref<64x512xf32, #tpu.memory_space<vmem>>, vector<64x512xf32>
    %cst_5 = arith.constant dense<0.000000e+00> : vector<16x512xf32>
    %4 = tpu.matmul %0, %3, %cst_5 {dimension_numbers = #tpu.dot_dimension_numbers<[1], [0], [0], [1], [0, 0, 1, 1], [], []>} : vector<16x64xf32>, vector<64x512xf32>, vector<16x512xf32> -> vector<16x512xf32>
    %5 = arith.negf %2 : vector<16x512xf32>
    %6 = math.exp %5 : vector<16x512xf32>
    %cst_6 = arith.constant 1.000000e+00 : f32
    %7 = vector.broadcast %cst_6 : f32 to vector<16x512xf32>
    %8 = arith.addf %7, %6 : vector<16x512xf32>
    %9 = arith.divf %7, %8 : vector<16x512xf32>
    %10 = arith.mulf %2, %9 : vector<16x512xf32>
    %11 = arith.mulf %10, %4 : vector<16x512xf32>
    %c0_7 = arith.constant 0 : index
    %c0_8 = arith.constant 0 : index
    %12 = vector.load %arg2[%c0_7, %c0_8] : memref<16x4xf32, #tpu.memory_space<vmem>>, vector<16x4xf32>
    %13 = vector.extract_strided_slice %11 {offsets = [0, 0], sizes = [16, 128], strides = [1, 1]} : vector<16x512xf32> to vector<16x128xf32>
    %14 = vector.extract_strided_slice %12 {offsets = [0, 0], sizes = [16, 1], strides = [1, 1]} : vector<16x4xf32> to vector<16x1xf32>
    %15 = vector.broadcast %14 : vector<16x1xf32> to vector<16x128xf32>
    %16 = arith.mulf %13, %15 : vector<16x128xf32>
    %17 = vector.extract_strided_slice %11 {offsets = [0, 128], sizes = [16, 128], strides = [1, 1]} : vector<16x512xf32> to vector<16x128xf32>
    %18 = vector.extract_strided_slice %12 {offsets = [0, 1], sizes = [16, 1], strides = [1, 1]} : vector<16x4xf32> to vector<16x1xf32>
    %19 = vector.broadcast %18 : vector<16x1xf32> to vector<16x128xf32>
    %20 = arith.mulf %17, %19 : vector<16x128xf32>
    %21 = vector.extract_strided_slice %11 {offsets = [0, 256], sizes = [16, 128], strides = [1, 1]} : vector<16x512xf32> to vector<16x128xf32>
    %22 = vector.extract_strided_slice %12 {offsets = [0, 2], sizes = [16, 1], strides = [1, 1]} : vector<16x4xf32> to vector<16x1xf32>
    %23 = vector.broadcast %22 : vector<16x1xf32> to vector<16x128xf32>
    %24 = arith.mulf %21, %23 : vector<16x128xf32>
    %25 = vector.extract_strided_slice %11 {offsets = [0, 384], sizes = [16, 128], strides = [1, 1]} : vector<16x512xf32> to vector<16x128xf32>
    %26 = vector.extract_strided_slice %12 {offsets = [0, 3], sizes = [16, 1], strides = [1, 1]} : vector<16x4xf32> to vector<16x1xf32>
    %27 = vector.broadcast %26 : vector<16x1xf32> to vector<16x128xf32>
    %28 = arith.mulf %25, %27 : vector<16x128xf32>
    %29 = tpu.concatenate %16, %20, %24, %28 in 1 : vector<16x128xf32>, vector<16x128xf32>, vector<16x128xf32>, vector<16x128xf32> -> vector<16x512xf32>
    %c0_9 = arith.constant 0 : index
    %c0_10 = arith.constant 0 : index
    %30 = vector.load %arg5[%c0_9, %c0_10] : memref<512x64xf32, #tpu.memory_space<vmem>>, vector<512x64xf32>
    %cst_11 = arith.constant dense<0.000000e+00> : vector<16x64xf32>
    %31 = tpu.matmul %29, %30, %cst_11 {dimension_numbers = #tpu.dot_dimension_numbers<[1], [0], [0], [1], [0, 0, 1, 1], [], []>} : vector<16x512xf32>, vector<512x64xf32>, vector<16x64xf32> -> vector<16x64xf32>
    %c0_12 = arith.constant 0 : index
    %c0_13 = arith.constant 0 : index
    %32 = vector.load %arg6[%c0_12, %c0_13] : memref<16x64xf32, #tpu.memory_space<vmem>>, vector<16x64xf32>
    %33 = arith.addf %32, %31 : vector<16x64xf32>
    %c0_14 = arith.constant 0 : index
    %c0_15 = arith.constant 0 : index
    %34 = vector.load %arg7[%c0_14, %c0_15] : memref<16x64xf32, #tpu.memory_space<vmem>>, vector<16x64xf32>
    tpu.vector_store %arg7[%c0_14, %c0_15], %33 {strides = array<i32>} : memref<16x64xf32, #tpu.memory_space<vmem>>, vector<16x64xf32>,
    return
  }
  func.func @transform_0(%arg0: i32) -> (i32, i32) {
    %c0_i32 = arith.constant 0 : i32
    %c0_i32_0 = arith.constant 0 : i32
    return %arg0, %c0_i32 : i32, i32
  }
  func.func @transform_1(%arg0: i32) -> (i32, i32) {
    %c0_i32 = arith.constant 0 : i32
    %c0_i32_0 = arith.constant 0 : i32
    return %arg0, %c0_i32 : i32, i32
  }
  func.func @transform_2(%arg0: i32) -> (i32, i32) {
    %c0_i32 = arith.constant 0 : i32
    %c0_i32_0 = arith.constant 0 : i32
    %c0_i32_1 = arith.constant 0 : i32
    return %c0_i32, %c0_i32_0 : i32, i32
  }
  func.func @transform_3(%arg0: i32) -> (i32, i32) {
    %c0_i32 = arith.constant 0 : i32
    %c0_i32_0 = arith.constant 0 : i32
    %c0_i32_1 = arith.constant 0 : i32
    return %c0_i32, %c0_i32_0 : i32, i32
  }
  func.func @transform_4(%arg0: i32) -> (i32, i32) {
    %c0_i32 = arith.constant 0 : i32
    %c0_i32_0 = arith.constant 0 : i32
    %c0_i32_1 = arith.constant 0 : i32
    return %c0_i32, %c0_i32_0 : i32, i32
  }
  func.func @transform_5(%arg0: i32) -> (i32, i32) {
    %c0_i32 = arith.constant 0 : i32
    %c0_i32_0 = arith.constant 0 : i32
    return %arg0, %c0_i32 : i32, i32
  }
  func.func @transform_6(%arg0: i32) -> (i32, i32) {
    %c0_i32 = arith.constant 0 : i32
    %c0_i32_0 = arith.constant 0 : i32
    return %arg0, %c0_i32 : i32, i32
  }
}

</mosaic_0001>

<llo_original>
// kernel: anemone_attention_decoder_layer.3
$region0: #{anemone_attention_decoder_layer.3}
  #allocation0 [shape = 'u32[]', space=smem, size = 0x4, offset = 0x4, fixed_abs, tag = 'smem constant byte address 0x4 - core index']
  #allocation1 [shape = 'u32[144,128]{1,0:T(1,128)}', space=vmem, size = 0x12000, scoped, tag = 'internal scratch']
  %s0 = inlined_call_operand.hbm [shape: f32[32,64], index: 0, kind: input, shape index: {}]
  %s1 = inlined_call_operand.vmem [shape: f32[1,64], index: 1, kind: input, shape index: {}]
  %s2 = inlined_call_operand.hbm [shape: f32[64,128], index: 2, kind: input, shape index: {}]
  %s3 = inlined_call_operand.vmem [shape: f32[32,128], index: 3, kind: output, shape index: {}]
  %s4 = sld [smem:[#allocation0]]
  $region53: #{anemone_attention_decoder_layer.3} parent=0
    _
  %s6 = ssub.s32 1, %s4
  %s7 = scalar_select 0, %s6, %s4
  $region1: #{anemone_attention_decoder_layer.3} parent=0
    #allocation2 [shape = 'u8[16384]{0}', space=vmem, size = 0x4000, scoped, tag = 'input window, operand 0']
    #allocation3 [shape = 's32[2]{0}', space=sflag, size = 0x8, scoped, tag = 'scoped memory for anemone_attention_decoder_layer.3']
    #allocation4 [shape = 'u8[32768]{0}', space=vmem, size = 0x8000, scoped, tag = 'input window, operand 2, single buffered']
    #allocation5 [shape = 's32[1]{0}', space=sflag, size = 0x4, scoped, tag = 'scoped memory for anemone_attention_decoder_layer.3']
    %8 = vsyncpa [#allocation3], 0
    %s9 = scalar_lea.sflag [#allocation3], 1
    %10 = vsyncpa %s9, 0
    %11 = vsyncpa [#allocation5], 0
    loop: start=0, step=1, limit=4
    $region2: #{anemone_attention_decoder_layer.3} parent=1 // loop_pre_header
      _
    $region3: #{anemone_attention_decoder_layer.3} parent=1 // loop_header
      %s13 = sphi 0, %s17
      %p14 = scmp.ge.s32.totalorder %s13, 4
      %s23 = sphi 0, %s25
      %s26 = sphi 0, %s23
      %s27 = sphi 0, %s26
      %s43 = sphi 0, %s27
      %s47 = sphi 0, %s47
      %s49 = sphi 0, %s47
      %s50 = sphi 0, %s49
      %s64 = sphi 0, %s50
      %s68 = sphi 0, %s68
      %s70 = sphi 0, %s68
      %s71 = sphi 0, %s70
      %s85 = sphi 0, %s71
      %s91 = sphi 0, %s93
      %s94 = sphi 0, %s91
      %s95 = sphi 0, %s94
      %s111 = sphi 0, %s95
    $region4: #{anemone_attention_decoder_layer.3} parent=1 // loop_header_branch
      %16 = sbr.rel (%p14) target = $region8
    $region5: #{anemone_attention_decoder_layer.3} parent=1 // loop_body
      %s18 = ssub.s32 %s13, 1
      %s19 = ssub.s32 %s13, 2
      %s20 = sadd.s32 %s13, 1
      %s21 = ssub.s32 %s13, %s20
      %p22 = scmp.eq.s32.totalorder %s21, 0
      %s24 = sadd.s32 %s23, 1
      %s25 = scalar_select %p22, %s23, %s24
      %p28 = pneg %p22
      %p29 = scmp.eq.s32.totalorder %s13, 1
      %p30 = por %p28, %p29
      %p31 = scmp.ne.s32.totalorder %s23, %s26
      %p32 = scmp.eq.s32.totalorder %s13, 0
      %p33 = por %p31, %p32
      %p34 = scmp.ne.s32.totalorder %s23, %s26
      %p35 = scmp.eq.s32.totalorder %s18, 1
      %p36 = por %p34, %p35
      %p37 = scmp.ne.s32.totalorder %s26, %s27
      %p38 = scmp.eq.s32.totalorder %s18, 0
      %p39 = por %p37, %p38
      %p40 = scmp.ne.s32.totalorder %s26, %s27
      %p41 = scmp.eq.s32.totalorder %s19, 1
      %p42 = por %p40, %p41
      %p44 = scmp.ne.s32.totalorder %s27, %s43
      %p45 = scmp.eq.s32.totalorder %s19, 0
      %p46 = por %p44, %p45
      %s48 = sadd.s32 %s47, 1
      %p51 = scmp.eq.s32.totalorder %s13, 1
      %p52 = scmp.ne.s32.totalorder %s47, %s49
      %p53 = scmp.eq.s32.totalorder %s13, 0
      %p54 = por %p52, %p53
      %p55 = scmp.ne.s32.totalorder %s47, %s49
      %p56 = scmp.eq.s32.totalorder %s18, 1
      %p57 = por %p55, %p56
      %p58 = scmp.ne.s32.totalorder %s49, %s50
      %p59 = scmp.eq.s32.totalorder %s18, 0
      %p60 = por %p58, %p59
      %p61 = scmp.ne.s32.totalorder %s49, %s50
      %p62 = scmp.eq.s32.totalorder %s19, 1
      %p63 = por %p61, %p62
      %p65 = scmp.ne.s32.totalorder %s50, %s64
      %p66 = scmp.eq.s32.totalorder %s19, 0
      %p67 = por %p65, %p66
      %s69 = sadd.s32 %s68, 1
      %p72 = scmp.eq.s32.totalorder %s13, 1
      %p73 = scmp.ne.s32.totalorder %s68, %s70
      %p74 = scmp.eq.s32.totalorder %s13, 0
      %p75 = por %p73, %p74
      %p76 = scmp.ne.s32.totalorder %s68, %s70
      %p77 = scmp.eq.s32.totalorder %s18, 1
      %p78 = por %p76, %p77
      %p79 = scmp.ne.s32.totalorder %s70, %s71
      %p80 = scmp.eq.s32.totalorder %s18, 0
      %p81 = por %p79, %p80
      %p82 = scmp.ne.s32.totalorder %s70, %s71
      %p83 = scmp.eq.s32.totalorder %s19, 1
      %p84 = por %p82, %p83
      %p86 = scmp.ne.s32.totalorder %s71, %s85
      %p87 = scmp.eq.s32.totalorder %s19, 0
      %p88 = por %p86, %p87
      %s89 = ssub.s32 %s13, %s20
      %p90 = scmp.eq.s32.totalorder %s89, 0
      %s92 = sadd.s32 %s91, 1
      %s93 = scalar_select %p90, %s91, %s92
      %p96 = pneg %p90
      %p97 = scmp.eq.s32.totalorder %s13, 1
      %p98 = por %p96, %p97
      %p99 = scmp.ne.s32.totalorder %s91, %s94
      %p100 = scmp.eq.s32.totalorder %s13, 0
      %p101 = por %p99, %p100
      %p102 = scmp.ne.s32.totalorder %s91, %s94
      %p103 = scmp.eq.s32.totalorder %s18, 1
      %p104 = por %p102, %p103
      %p105 = scmp.ne.s32.totalorder %s94, %s95
      %p106 = scmp.eq.s32.totalorder %s18, 0
      %p107 = por %p105, %p106
      %p108 = scmp.ne.s32.totalorder %s94, %s95
      %p109 = scmp.eq.s32.totalorder %s19, 1
      %p110 = por %p108, %p109
      %p112 = scmp.ne.s32.totalorder %s95, %s111
      %p113 = scmp.eq.s32.totalorder %s19, 0
      %p114 = por %p112, %p113
      %p115 = scmp.le.s32.totalorder 1, %s13
      %p116 = scmp.lt.s32.totalorder %s13, 3
      %p117 = pnand %p115, %p116
      %p118 = pneg %p117
      // Predicated region
      $region9: #{anemone_attention_decoder_layer.3} parent=5 // pred_check
        _
      $region10: #{anemone_attention_decoder_layer.3} parent=5 // pred_check_branch
        %120 = sbr.rel (%p117) target = $region12
      $region11: #{anemone_attention_decoder_layer.3} parent=5 // pred_region
        %s121 = ssub.s32 %s13, 1
        // Predicated region
        $region13: #{anemone_attention_decoder_layer.3} parent=11 // pred_check
          %p122 = pneg %p60
        $region14: #{anemone_attention_decoder_layer.3} parent=11 // pred_check_branch
          %124 = sbr.rel (%p122) target = $region16
        $region15: #{anemone_attention_decoder_layer.3} parent=11 // pred_region
          _
        $region16: #{anemone_attention_decoder_layer.3} parent=11 // pred_fallthru
          _
        // Predicated region
        $region17: #{anemone_attention_decoder_layer.3} parent=11 // pred_check
          %p125 = pneg %p81
        $region18: #{anemone_attention_decoder_layer.3} parent=11 // pred_check_branch
          %127 = sbr.rel (%p125) target = $region20
        $region19: #{anemone_attention_decoder_layer.3} parent=11 // pred_region
          %s129 = ssub.s32 1024, 1024
          %130 = vsyncadd [#allocation5], %s129
          %s131 = sshll.u32 [#allocation4], 4
          %s132 = int_to_ptr.vmem [resolvable:$true] %s131
          %137 = dma.hbm_to_vmem [thread:$0]  %s2, 1024, %s132, [#allocation5], 128, 128, 8
        $region20: #{anemone_attention_decoder_layer.3} parent=11 // pred_fallthru
          _
      $region12: #{anemone_attention_decoder_layer.3} parent=5 // pred_fallthru
        _
      %p138 = scmp.lt.s32.totalorder %s13, 2
      // Predicated region
      $region21: #{anemone_attention_decoder_layer.3} parent=5 // pred_check
        %p139 = pneg %p138
      $region22: #{anemone_attention_decoder_layer.3} parent=5 // pred_check_branch
        %141 = sbr.rel (%p139) target = $region24
      $region23: #{anemone_attention_decoder_layer.3} parent=5 // pred_region
        // Predicated region
        $region25: #{anemone_attention_decoder_layer.3} parent=23 // pred_check
          %p142 = pneg %p33
        $region26: #{anemone_attention_decoder_layer.3} parent=23 // pred_check_branch
          %144 = sbr.rel (%p142) target = $region28
        $region27: #{anemone_attention_decoder_layer.3} parent=23 // pred_region
          %s145 = sand.u32 %s23, 1
          %s146 = scalar_lea.sflag [#allocation3], %s145
          %s147 = sand.u32 %s23, 1
          %s148 = smul.addr %s147, 16
          %s149 = scalar_lea.vmem [#allocation2], %s148
          %s150 = smul.u32 2, %s13
          %s152 = ssub.s32 256, 256
          %153 = vsyncadd %s146, %s152
          %s154 = smul.addr %s150, 128
          %s155 = scalar_lea.hbm %s0, %s154
          %s156 = sshll.u32 %s149, 4
          %s157 = int_to_ptr.vmem [resolvable:$true] %s156
          %162 = dma.hbm_to_vmem [thread:$0]  %s155, 256, %s157, %s146, 128, 128, 8
        $region28: #{anemone_attention_decoder_layer.3} parent=23 // pred_fallthru
          _
      $region24: #{anemone_attention_decoder_layer.3} parent=5 // pred_fallthru
        _
      %p163 = scmp.le.s32.totalorder 1, %s13
      %p164 = scmp.lt.s32.totalorder %s13, 3
      %p165 = pnand %p163, %p164
      %p166 = pneg %p165
      // Predicated region
      $region29: #{anemone_attention_decoder_layer.3} parent=5 // pred_check
        _
      $region30: #{anemone_attention_decoder_layer.3} parent=5 // pred_check_branch
        %168 = sbr.rel (%p165) target = $region32
      $region31: #{anemone_attention_decoder_layer.3} parent=5 // pred_region
        %s169 = ssub.s32 %s13, 1
        %s170 = sand.u32 %s26, 1
        %s171 = scalar_lea.sflag [#allocation3], %s170
        %s172 = sand.u32 %s26, 1
        %s173 = smul.addr %s172, 16
        %s174 = scalar_lea.vmem [#allocation2], %s173
        // Predicated region
        $region33: #{anemone_attention_decoder_layer.3} parent=31 // pred_check
          %p175 = pneg %p39
        $region34: #{anemone_attention_decoder_layer.3} parent=31 // pred_check_branch
          %177 = sbr.rel (%p175) target = $region36
        $region35: #{anemone_attention_decoder_layer.3} parent=31 // pred_region
          %178 = dma.done %s171, 256
        $region36: #{anemone_attention_decoder_layer.3} parent=31 // pred_fallthru
          _
        // Predicated region
        $region37: #{anemone_attention_decoder_layer.3} parent=31 // pred_check
          %p179 = pneg %p81
        $region38: #{anemone_attention_decoder_layer.3} parent=31 // pred_check_branch
          %181 = sbr.rel (%p179) target = $region40
        $region39: #{anemone_attention_decoder_layer.3} parent=31 // pred_region
          %182 = dma.done [#allocation5], 1024
        $region40: #{anemone_attention_decoder_layer.3} parent=31 // pred_fallthru
          _
        %s183 = sand.u32 %s26, 1
        %s184 = scalar_lea.sflag [#allocation3], %s183
        %s185 = sand.u32 %s26, 1
        %s186 = smul.addr %s185, 16
        %s187 = scalar_lea.vmem [#allocation2], %s186
        %p188 = pneg %p39
        %p189 = pneg %p36
        %p190 = pneg %p60
        %p191 = pneg %p57
        %p192 = pneg %p81
        %p193 = pneg %p78
        %p194 = pneg %p107
        %p195 = pneg %p104
        %s196 = smul.u32 2, %s18
        %p197 = scmp.lt.s32.totalorder %s196, 3
        %s198 = scalar_select %p197, %s196, 3
        %s199 = smul.addr %s198, 8
        %s200 = scalar_lea.vmem %s3, %s199
        %s201 = smul.u32 2, %s18
        %s202 = smul.u32 2, %s18
        %p203 = scmp.lt.s32.totalorder %s202, 3
        %s204 = scalar_select %p203, %s202, 3
        %s205 = smul.addr %s204, 8
        %s206 = scalar_lea.vmem %s3, %s205
        %s207 = smul.u32 2, %s18
        %v208 = vld [vmem:[%s174] sm:$0xff]
        %v209 = vld [vmem:[%s174 + $0x8] sm:$0xff]
        %v210 = vmul.f32 %v208, %v208
        %v211 = vmul.f32 %v209, %v209
        %vm212 = vcmask 523264
        %v213 = vsel %vm212, %v210, 0.0
        %214 = vadd.xlane.f32.xlu0 %v213
        %v215 = vpop.xlane.xlu0 %214
        %v216 = vsel %vm212, %v211, 0.0
        %217 = vadd.xlane.f32.xlu0 %v216
        %v218 = vpop.xlane.xlu0 %217
        %v219 = vrcp.pop 64.0
        %v220 = vmul.f32 %v215, %v219
        %v221 = vmul.f32 %v218, %v219
        %v222 = vadd.f32 %v220, 1e-06
        %v223 = vadd.f32 %v221, 1e-06
        %v224 = vrsqrt.pop %v222
        %v225 = vrsqrt.pop %v223
        %v226 = vmul.f32 %v208, %v224
        %v227 = vmul.f32 %v209, %v225
        %v228 = vld [vmem:[%s1] sm:$0x1]
        %v230 = vlaneseq
        %v231 = vshrl.u32 %v230, 7
        %v232 = vsub.s32 0, %v231
        %v233 = vrot.slane %v228, %v232
        %v235 = vmul.f32 %v226, %v233
        %v236 = vmul.f32 %v227, %v233
        %v237 = vld [vmem:[#allocation4] sm:$0xff]
        %v238 = vld [vmem:[#allocation4 + $0x8] sm:$0xff]
        %v239 = vld [vmem:[#allocation4 + $0x10] sm:$0xff]
        %v240 = vld [vmem:[#allocation4 + $0x18] sm:$0xff]
        %v241 = vld [vmem:[#allocation4 + $0x20] sm:$0xff]
        %v242 = vld [vmem:[#allocation4 + $0x28] sm:$0xff]
        %v243 = vld [vmem:[#allocation4 + $0x30] sm:$0xff]
        %v244 = vld [vmem:[#allocation4 + $0x38] sm:$0xff]
        %v246 = vsel %vm212, %v235, 0
        %v249 = vsel %vm212, %v236, 0
        %251 = vmatprep.subr.mxu0 0.0
        %252 = vmatpush1.msra.mxu0 %v237
        %253 = vmatprep.subr.mxu0 0.0
        %254 = vmatpush1.msra.mxu0 %v238
        %255 = vmatprep.subr.mxu0 0.0
        %256 = vmatpush1.msra.mxu0 %v239
        %257 = vmatprep.subr.mxu0 0.0
        %258 = vmatpush1.msra.mxu0 %v240
        %259 = vmatprep.subr.mxu0 0.0
        %260 = vmatpush1.msra.mxu0 %v241
        %261 = vmatprep.subr.mxu0 0.0
        %262 = vmatpush1.msra.mxu0 %v242
        %263 = vmatprep.subr.mxu0 0.0
        %264 = vmatpush1.msra.mxu0 %v243
        %265 = vmatprep.subr.mxu0 0.0
        %266 = vmatpush1.msra.mxu0 %v244
        %267 = vmatprep.subr.mxu0 0.0
        %268 = vmatpush1.msra.mxu0 0.0
        %269 = vmatprep.subr.mxu0 0.0
        %270 = vmatpush1.msra.mxu0 0.0
        %271 = vmatprep.subr.mxu0 0.0
        %272 = vmatpush1.msra.mxu0 0.0
        %273 = vmatprep.subr.mxu0 0.0
        %274 = vmatpush1.msra.mxu0 0.0
        %275 = vmatprep.subr.mxu0 0.0
        %276 = vmatpush1.msra.mxu0 0.0
        %277 = vmatprep.subr.mxu0 0.0
        %278 = vmatpush1.msra.mxu0 0.0
        %279 = vmatprep.subr.mxu0 0.0
        %280 = vmatpush1.msra.mxu0 0.0
        %281 = vmatprep.subr.mxu0 0.0
        %282 = vmatpush1.msra.mxu0 0.0
        %283 = vmatprep.subr.mxu0 0.0
        %284 = vmatpush1.msra.mxu0 0.0
        %285 = vmatprep.subr.mxu0 0.0
        %286 = vmatpush1.msra.mxu0 0.0
        %287 = vmatprep.subr.mxu0 0.0
        %288 = vmatpush1.msra.mxu0 0.0
        %289 = vmatprep.subr.mxu0 0.0
        %290 = vmatpush1.msra.mxu0 0.0
        %291 = vmatprep.subr.mxu0 0.0
        %292 = vmatpush1.msra.mxu0 0.0
        %293 = vmatprep.subr.mxu0 0.0
        %294 = vmatpush1.msra.mxu0 0.0
        %295 = vmatprep.subr.mxu0 0.0
        %296 = vmatpush1.msra.mxu0 0.0
        %297 = vmatprep.subr.mxu0 0.0
        %298 = vmatpush1.msra.mxu0 0.0
        %299 = vmatprep.subr.mxu0 0.0
        %300 = vmatpush1.msra.mxu0 0.0
        %301 = vmatprep.subr.mxu0 0.0
        %302 = vmatpush1.msra.mxu0 0.0
        %303 = vmatprep.subr.mxu0 0.0
        %304 = vmatpush1.msra.mxu0 0.0
        %305 = vmatprep.subr.mxu0 0.0
        %306 = vmatpush1.msra.mxu0 0.0
        %307 = vmatprep.subr.mxu0 0.0
        %308 = vmatpush1.msra.mxu0 0.0
        %309 = vmatprep.subr.mxu0 0.0
        %310 = vmatpush1.msra.mxu0 0.0
        %311 = vmatprep.subr.mxu0 0.0
        %312 = vmatpush1.msra.mxu0 0.0
        %313 = vmatprep.subr.mxu0 0.0
        %314 = vmatpush1.msra.mxu0 0.0
        %315 = vmatprep.mubr.f32.mxu0 0.0
        %316 = vmatmul.mubr.f32.gmra.mrb[0].mxu0 %v246
        %v317 = vpop.f32.mrb[0].mxu0
        %v318 = vadd.f32 0.0, %v317
        %v319 = vpop.f32.mrb[0].mxu0
        %320 = vmatprep.mubr.f32.mxu0 0.0
        %321 = vmatmul.mubr.f32.gmra.mrb[0].mxu0 %v249
        %v322 = vpop.f32.mrb[0].mxu0
        %v323 = vadd.f32 0.0, %v322
        %v324 = vpop.f32.mrb[0].mxu0
        %325 = vdwg.mxu0
        %326 = vst [vmem:[%s206] sm:$0xff] %v318
        %327 = vst [vmem:[%s206 + $0x8] sm:$0xff] %v323
        %s328 = smul.u32 2, %s18
        %p329 = scmp.lt.s32.totalorder %s328, 3
        %s330 = scalar_select %p329, %s328, 3
        %s331 = smul.addr %s330, 8
        %s332 = scalar_lea.vmem %s3, %s331
        // Predicated region
        $region41: #{anemone_attention_decoder_layer.3} parent=31 // pred_check
          %p333 = pneg %p104
        $region42: #{anemone_attention_decoder_layer.3} parent=31 // pred_check_branch
          %335 = sbr.rel (%p333) target = $region44
        $region43: #{anemone_attention_decoder_layer.3} parent=31 // pred_region
          %s336 = smul.u32 2, %s18
        $region44: #{anemone_attention_decoder_layer.3} parent=31 // pred_fallthru
          _
      $region32: #{anemone_attention_decoder_layer.3} parent=5 // pred_fallthru
        _
      %p337 = scmp.le.s32.totalorder 2, %s13
      // Predicated region
      $region45: #{anemone_attention_decoder_layer.3} parent=5 // pred_check
        %p338 = pneg %p337
      $region46: #{anemone_attention_decoder_layer.3} parent=5 // pred_check_branch
        %340 = sbr.rel (%p338) target = $region48
      $region47: #{anemone_attention_decoder_layer.3} parent=5 // pred_region
        %s341 = ssub.s32 %s13, 2
        // Predicated region
        $region49: #{anemone_attention_decoder_layer.3} parent=47 // pred_check
          %p342 = pneg %p110
        $region50: #{anemone_attention_decoder_layer.3} parent=47 // pred_check_branch
          %344 = sbr.rel (%p342) target = $region52
        $region51: #{anemone_attention_decoder_layer.3} parent=47 // pred_region
          %s345 = smul.u32 2, %s19
          %p346 = scmp.lt.s32.totalorder %s345, 3
          %s347 = scalar_select %p346, %s345, 3
          %s348 = smul.addr %s347, 8
          %s349 = scalar_lea.vmem %s3, %s348
        $region52: #{anemone_attention_decoder_layer.3} parent=47 // pred_fallthru
          _
      $region48: #{anemone_attention_decoder_layer.3} parent=5 // pred_fallthru
        _
    $region6: #{anemone_attention_decoder_layer.3} parent=1 // loop_footer
      %s17 = sadd.s32 1, %s13
    $region7: #{anemone_attention_decoder_layer.3} parent=1 // loop_footer_branch
      %12 = sbr.rel target = $region3
    $region8: #{anemone_attention_decoder_layer.3} parent=1 // loop_exit
      _
    %350 = vsyncpa [#allocation3], 1
    %s351 = scalar_lea.sflag [#allocation3], 1
    %352 = vsyncpa %s351, 1
    %353 = vsyncpa [#allocation5], 1

// kernel: anemone_attention_decoder_layer.4
$region0: #{anemone_attention_decoder_layer.4}
  #allocation0 [shape = 'u32[]', space=smem, size = 0x4, offset = 0x4, fixed_abs, tag = 'smem constant byte address 0x4 - core index']
  #allocation1 [shape = 'u32[144,128]{1,0:T(1,128)}', space=vmem, size = 0x12000, scoped, tag = 'internal scratch']
  %s0 = inlined_call_operand.vmem [shape: f32[32,128], index: 0, kind: input, shape index: {}]
  %s1 = inlined_call_operand.vmem [shape: f32[64,64], index: 1, kind: input, shape index: {}]
  %s2 = inlined_call_operand.vmem [shape: f32[32,64], index: 2, kind: input, shape index: {}]
  %s3 = inlined_call_operand.vmem [shape: f32[1,64], index: 3, kind: input, shape index: {}]
  %s4 = inlined_call_operand.vmem [shape: f32[64,4], index: 4, kind: input, shape index: {}]
  %s5 = inlined_call_operand.vmem [shape: f32[32,64], index: 5, kind: output, shape index: {0}]
  %s6 = inlined_call_operand.vmem [shape: f32[32,64], index: 6, kind: output, shape index: {1}]
  %s7 = inlined_call_operand.vmem [shape: f32[32,4], index: 7, kind: output, shape index: {2}]
  %8 = xla_tuple %s5, %s6, %s7
  %s9 = sld [smem:[#allocation0]]
  $region69: #{anemone_attention_decoder_layer.4} parent=0
    _
  %s11 = ssub.s32 1, %s9
  %s12 = scalar_select 0, %s11, %s9
  loop: start=0, step=1, limit=4
  $region2: #{anemone_attention_decoder_layer.4} parent=0 // loop_pre_header
    _
  $region3: #{anemone_attention_decoder_layer.4} parent=0 // loop_header
    %s14 = sphi 0, %s18
    %p15 = scmp.ge.s32.totalorder %s14, 4
    %s24 = sphi 0, %s26
    %s27 = sphi 0, %s24
    %s28 = sphi 0, %s27
    %s44 = sphi 0, %s28
    %s48 = sphi 0, %s48
    %s50 = sphi 0, %s48
    %s51 = sphi 0, %s50
    %s65 = sphi 0, %s51
    %s71 = sphi 0, %s73
    %s74 = sphi 0, %s71
    %s75 = sphi 0, %s74
    %s91 = sphi 0, %s75
    %s95 = sphi 0, %s95
    %s97 = sphi 0, %s95
    %s98 = sphi 0, %s97
    %s112 = sphi 0, %s98
    %s116 = sphi 0, %s116
    %s118 = sphi 0, %s116
    %s119 = sphi 0, %s118
    %s133 = sphi 0, %s119
    %s139 = sphi 0, %s141
    %s142 = sphi 0, %s139
    %s143 = sphi 0, %s142
    %s159 = sphi 0, %s143
    %s165 = sphi 0, %s167
    %s168 = sphi 0, %s165
    %s169 = sphi 0, %s168
    %s185 = sphi 0, %s169
    %s191 = sphi 0, %s193
    %s194 = sphi 0, %s191
    %s195 = sphi 0, %s194
    %s211 = sphi 0, %s195
  $region4: #{anemone_attention_decoder_layer.4} parent=0 // loop_header_branch
    %17 = sbr.rel (%p15) target = $region8
  $region5: #{anemone_attention_decoder_layer.4} parent=0 // loop_body
    %s19 = ssub.s32 %s14, 1
    %s20 = ssub.s32 %s14, 2
    %s21 = sadd.s32 %s14, 1
    %s22 = ssub.s32 %s14, %s21
    %p23 = scmp.eq.s32.totalorder %s22, 0
    %s25 = sadd.s32 %s24, 1
    %s26 = scalar_select %p23, %s24, %s25
    %p29 = pneg %p23
    %p30 = scmp.eq.s32.totalorder %s14, 1
    %p31 = por %p29, %p30
    %p32 = scmp.ne.s32.totalorder %s24, %s27
    %p33 = scmp.eq.s32.totalorder %s14, 0
    %p34 = por %p32, %p33
    %p35 = scmp.ne.s32.totalorder %s24, %s27
    %p36 = scmp.eq.s32.totalorder %s19, 1
    %p37 = por %p35, %p36
    %p38 = scmp.ne.s32.totalorder %s27, %s28
    %p39 = scmp.eq.s32.totalorder %s19, 0
    %p40 = por %p38, %p39
    %p41 = scmp.ne.s32.totalorder %s27, %s28
    %p42 = scmp.eq.s32.totalorder %s20, 1
    %p43 = por %p41, %p42
    %p45 = scmp.ne.s32.totalorder %s28, %s44
    %p46 = scmp.eq.s32.totalorder %s20, 0
    %p47 = por %p45, %p46
    %s49 = sadd.s32 %s48, 1
    %p52 = scmp.eq.s32.totalorder %s14, 1
    %p53 = scmp.ne.s32.totalorder %s48, %s50
    %p54 = scmp.eq.s32.totalorder %s14, 0
    %p55 = por %p53, %p54
    %p56 = scmp.ne.s32.totalorder %s48, %s50
    %p57 = scmp.eq.s32.totalorder %s19, 1
    %p58 = por %p56, %p57
    %p59 = scmp.ne.s32.totalorder %s50, %s51
    %p60 = scmp.eq.s32.totalorder %s19, 0
    %p61 = por %p59, %p60
    %p62 = scmp.ne.s32.totalorder %s50, %s51
    %p63 = scmp.eq.s32.totalorder %s20, 1
    %p64 = por %p62, %p63
    %p66 = scmp.ne.s32.totalorder %s51, %s65
    %p67 = scmp.eq.s32.totalorder %s20, 0
    %p68 = por %p66, %p67
    %s69 = ssub.s32 %s14, %s21
    %p70 = scmp.eq.s32.totalorder %s69, 0
    %s72 = sadd.s32 %s71, 1
    %s73 = scalar_select %p70, %s71, %s72
    %p76 = pneg %p70
    %p77 = scmp.eq.s32.totalorder %s14, 1
    %p78 = por %p76, %p77
    %p79 = scmp.ne.s32.totalorder %s71, %s74
    %p80 = scmp.eq.s32.totalorder %s14, 0
    %p81 = por %p79, %p80
    %p82 = scmp.ne.s32.totalorder %s71, %s74
    %p83 = scmp.eq.s32.totalorder %s19, 1
    %p84 = por %p82, %p83
    %p85 = scmp.ne.s32.totalorder %s74, %s75
    %p86 = scmp.eq.s32.totalorder %s19, 0
    %p87 = por %p85, %p86
    %p88 = scmp.ne.s32.totalorder %s74, %s75
    %p89 = scmp.eq.s32.totalorder %s20, 1
    %p90 = por %p88, %p89
    %p92 = scmp.ne.s32.totalorder %s75, %s91
    %p93 = scmp.eq.s32.totalorder %s20, 0
    %p94 = por %p92, %p93
    %s96 = sadd.s32 %s95, 1
    %p99 = scmp.eq.s32.totalorder %s14, 1
    %p100 = scmp.ne.s32.totalorder %s95, %s97
    %p101 = scmp.eq.s32.totalorder %s14, 0
    %p102 = por %p100, %p101
    %p103 = scmp.ne.s32.totalorder %s95, %s97
    %p104 = scmp.eq.s32.totalorder %s19, 1
    %p105 = por %p103, %p104
    %p106 = scmp.ne.s32.totalorder %s97, %s98
    %p107 = scmp.eq.s32.totalorder %s19, 0
    %p108 = por %p106, %p107
    %p109 = scmp.ne.s32.totalorder %s97, %s98
    %p110 = scmp.eq.s32.totalorder %s20, 1
    %p111 = por %p109, %p110
    %p113 = scmp.ne.s32.totalorder %s98, %s112
    %p114 = scmp.eq.s32.totalorder %s20, 0
    %p115 = por %p113, %p114
    %s117 = sadd.s32 %s116, 1
    %p120 = scmp.eq.s32.totalorder %s14, 1
    %p121 = scmp.ne.s32.totalorder %s116, %s118
    %p122 = scmp.eq.s32.totalorder %s14, 0
    %p123 = por %p121, %p122
    %p124 = scmp.ne.s32.totalorder %s116, %s118
    %p125 = scmp.eq.s32.totalorder %s19, 1
    %p126 = por %p124, %p125
    %p127 = scmp.ne.s32.totalorder %s118, %s119
    %p128 = scmp.eq.s32.totalorder %s19, 0
    %p129 = por %p127, %p128
    %p130 = scmp.ne.s32.totalorder %s118, %s119
    %p131 = scmp.eq.s32.totalorder %s20, 1
    %p132 = por %p130, %p131
    %p134 = scmp.ne.s32.totalorder %s119, %s133
    %p135 = scmp.eq.s32.totalorder %s20, 0
    %p136 = por %p134, %p135
    %s137 = ssub.s32 %s14, %s21
    %p138 = scmp.eq.s32.totalorder %s137, 0
    %s140 = sadd.s32 %s139, 1
    %s141 = scalar_select %p138, %s139, %s140
    %p144 = pneg %p138
    %p145 = scmp.eq.s32.totalorder %s14, 1
    %p146 = por %p144, %p145
    %p147 = scmp.ne.s32.totalorder %s139, %s142
    %p148 = scmp.eq.s32.totalorder %s14, 0
    %p149 = por %p147, %p148
    %p150 = scmp.ne.s32.totalorder %s139, %s142
    %p151 = scmp.eq.s32.totalorder %s19, 1
    %p152 = por %p150, %p151
    %p153 = scmp.ne.s32.totalorder %s142, %s143
    %p154 = scmp.eq.s32.totalorder %s19, 0
    %p155 = por %p153, %p154
    %p156 = scmp.ne.s32.totalorder %s142, %s143
    %p157 = scmp.eq.s32.totalorder %s20, 1
    %p158 = por %p156, %p157
    %p160 = scmp.ne.s32.totalorder %s143, %s159
    %p161 = scmp.eq.s32.totalorder %s20, 0
    %p162 = por %p160, %p161
    %s163 = ssub.s32 %s14, %s21
    %p164 = scmp.eq.s32.totalorder %s163, 0
    %s166 = sadd.s32 %s165, 1
    %s167 = scalar_select %p164, %s165, %s166
    %p170 = pneg %p164
    %p171 = scmp.eq.s32.totalorder %s14, 1
    %p172 = por %p170, %p171
    %p173 = scmp.ne.s32.totalorder %s165, %s168
    %p174 = scmp.eq.s32.totalorder %s14, 0
    %p175 = por %p173, %p174
    %p176 = scmp.ne.s32.totalorder %s165, %s168
    %p177 = scmp.eq.s32.totalorder %s19, 1
    %p178 = por %p176, %p177
    %p179 = scmp.ne.s32.totalorder %s168, %s169
    %p180 = scmp.eq.s32.totalorder %s19, 0
    %p181 = por %p179, %p180
    %p182 = scmp.ne.s32.totalorder %s168, %s169
    %p183 = scmp.eq.s32.totalorder %s20, 1
    %p184 = por %p182, %p183
    %p186 = scmp.ne.s32.totalorder %s169, %s185
    %p187 = scmp.eq.s32.totalorder %s20, 0
    %p188 = por %p186, %p187
    %s189 = ssub.s32 %s14, %s21
    %p190 = scmp.eq.s32.totalorder %s189, 0
    %s192 = sadd.s32 %s191, 1
    %s193 = scalar_select %p190, %s191, %s192
    %p196 = pneg %p190
    %p197 = scmp.eq.s32.totalorder %s14, 1
    %p198 = por %p196, %p197
    %p199 = scmp.ne.s32.totalorder %s191, %s194
    %p200 = scmp.eq.s32.totalorder %s14, 0
    %p201 = por %p199, %p200
    %p202 = scmp.ne.s32.totalorder %s191, %s194
    %p203 = scmp.eq.s32.totalorder %s19, 1
    %p204 = por %p202, %p203
    %p205 = scmp.ne.s32.totalorder %s194, %s195
    %p206 = scmp.eq.s32.totalorder %s19, 0
    %p207 = por %p205, %p206
    %p208 = scmp.ne.s32.totalorder %s194, %s195
    %p209 = scmp.eq.s32.totalorder %s20, 1
    %p210 = por %p208, %p209
    %p212 = scmp.ne.s32.totalorder %s195, %s211
    %p213 = scmp.eq.s32.totalorder %s20, 0
    %p214 = por %p212, %p213
    %p215 = scmp.le.s32.totalorder 1, %s14
    %p216 = scmp.lt.s32.totalorder %s14, 3
    %p217 = pnand %p215, %p216
    %p218 = pneg %p217
    // Predicated region
    $region9: #{anemone_attention_decoder_layer.4} parent=5 // pred_check
      _
    $region10: #{anemone_attention_decoder_layer.4} parent=5 // pred_check_branch
      %220 = sbr.rel (%p217) target = $region12
    $region11: #{anemone_attention_decoder_layer.4} parent=5 // pred_region
      %s221 = ssub.s32 %s14, 1
      // Predicated region
      $region13: #{anemone_attention_decoder_layer.4} parent=11 // pred_check
        %p222 = pneg %p61
      $region14: #{anemone_attention_decoder_layer.4} parent=11 // pred_check_branch
        %224 = sbr.rel (%p222) target = $region16
      $region15: #{anemone_attention_decoder_layer.4} parent=11 // pred_region
        _
      $region16: #{anemone_attention_decoder_layer.4} parent=11 // pred_fallthru
        _
      // Predicated region
      $region17: #{anemone_attention_decoder_layer.4} parent=11 // pred_check
        %p225 = pneg %p108
      $region18: #{anemone_attention_decoder_layer.4} parent=11 // pred_check_branch
        %227 = sbr.rel (%p225) target = $region20
      $region19: #{anemone_attention_decoder_layer.4} parent=11 // pred_region
        _
      $region20: #{anemone_attention_decoder_layer.4} parent=11 // pred_fallthru
        _
      // Predicated region
      $region21: #{anemone_attention_decoder_layer.4} parent=11 // pred_check
        %p228 = pneg %p129
      $region22: #{anemone_attention_decoder_layer.4} parent=11 // pred_check_branch
        %230 = sbr.rel (%p228) target = $region24
      $region23: #{anemone_attention_decoder_layer.4} parent=11 // pred_region
        _
      $region24: #{anemone_attention_decoder_layer.4} parent=11 // pred_fallthru
        _
    $region12: #{anemone_attention_decoder_layer.4} parent=5 // pred_fallthru
      _
    %p231 = scmp.lt.s32.totalorder %s14, 2
    // Predicated region
    $region25: #{anemone_attention_decoder_layer.4} parent=5 // pred_check
      %p232 = pneg %p231
    $region26: #{anemone_attention_decoder_layer.4} parent=5 // pred_check_branch
      %234 = sbr.rel (%p232) target = $region28
    $region27: #{anemone_attention_decoder_layer.4} parent=5 // pred_region
      // Predicated region
      $region29: #{anemone_attention_decoder_layer.4} parent=27 // pred_check
        %p235 = pneg %p34
      $region30: #{anemone_attention_decoder_layer.4} parent=27 // pred_check_branch
        %237 = sbr.rel (%p235) target = $region32
      $region31: #{anemone_attention_decoder_layer.4} parent=27 // pred_region
        %s238 = smul.u32 2, %s14
        %p239 = scmp.lt.s32.totalorder %s238, 3
        %s240 = scalar_select %p239, %s238, 3
        %s241 = smul.addr %s240, 8
        %s242 = scalar_lea.vmem %s0, %s241
        %s243 = smul.u32 2, %s14
      $region32: #{anemone_attention_decoder_layer.4} parent=27 // pred_fallthru
        _
      // Predicated region
      $region33: #{anemone_attention_decoder_layer.4} parent=27 // pred_check
        %p244 = pneg %p81
      $region34: #{anemone_attention_decoder_layer.4} parent=27 // pred_check_branch
        %246 = sbr.rel (%p244) target = $region36
      $region35: #{anemone_attention_decoder_layer.4} parent=27 // pred_region
        %s247 = smul.u32 2, %s14
        %p248 = scmp.lt.s32.totalorder %s247, 3
        %s249 = scalar_select %p248, %s247, 3
        %s250 = smul.addr %s249, 8
        %s251 = scalar_lea.vmem %s2, %s250
        %s252 = smul.u32 2, %s14
      $region36: #{anemone_attention_decoder_layer.4} parent=27 // pred_fallthru
        _
    $region28: #{anemone_attention_decoder_layer.4} parent=5 // pred_fallthru
      _
    %p253 = scmp.le.s32.totalorder 1, %s14
    %p254 = scmp.lt.s32.totalorder %s14, 3
    %p255 = pnand %p253, %p254
    %p256 = pneg %p255
    // Predicated region
    $region37: #{anemone_attention_decoder_layer.4} parent=5 // pred_check
      _
    $region38: #{anemone_attention_decoder_layer.4} parent=5 // pred_check_branch
      %258 = sbr.rel (%p255) target = $region40
    $region39: #{anemone_attention_decoder_layer.4} parent=5 // pred_region
      %s259 = ssub.s32 %s14, 1
      %s260 = smul.u32 2, %s19
      %p261 = scmp.lt.s32.totalorder %s260, 3
      %s262 = scalar_select %p261, %s260, 3
      %s263 = smul.addr %s262, 8
      %s264 = scalar_lea.vmem %s0, %s263
      %p265 = pneg %p40
      %p266 = pneg %p37
      %p267 = pneg %p61
      %p268 = pneg %p58
      %s269 = smul.u32 2, %s19
      %p270 = scmp.lt.s32.totalorder %s269, 3
      %s271 = scalar_select %p270, %s269, 3
      %s272 = smul.addr %s271, 8
      %s273 = scalar_lea.vmem %s2, %s272
      %p274 = pneg %p87
      %p275 = pneg %p84
      %p276 = pneg %p108
      %p277 = pneg %p105
      %p278 = pneg %p129
      %p279 = pneg %p126
      %p280 = pneg %p155
      %p281 = pneg %p152
      %s282 = smul.u32 2, %s19
      %p283 = scmp.lt.s32.totalorder %s282, 3
      %s284 = scalar_select %p283, %s282, 3
      %s285 = smul.addr %s284, 8
      %s286 = scalar_lea.vmem %s5, %s285
      %p287 = pneg %p181
      %p288 = pneg %p178
      %s289 = smul.u32 2, %s19
      %p290 = scmp.lt.s32.totalorder %s289, 3
      %s291 = scalar_select %p290, %s289, 3
      %s292 = smul.addr %s291, 8
      %s293 = scalar_lea.vmem %s6, %s292
      %p294 = pneg %p207
      %p295 = pneg %p204
      %s296 = smul.u32 2, %s19
      %p297 = scmp.lt.s32.totalorder %s296, 3
      %s298 = scalar_select %p297, %s296, 3
      %s299 = smul.addr %s298, 8
      %s300 = scalar_lea.vmem %s7, %s299
      %s301 = smul.u32 2, %s19
      %p302 = scmp.lt.s32.totalorder %s301, 3
      %s303 = scalar_select %p302, %s301, 3
      %s304 = smul.addr %s303, 8
      %s305 = scalar_lea.vmem %s0, %s304
      %s306 = smul.u32 2, %s19
      %s307 = smul.u32 2, %s19
      %p308 = scmp.lt.s32.totalorder %s307, 3
      %s309 = scalar_select %p308, %s307, 3
      %s310 = smul.addr %s309, 8
      %s311 = scalar_lea.vmem %s2, %s310
      %s312 = smul.u32 2, %s19
      %s313 = smul.u32 2, %s19
      %p314 = scmp.lt.s32.totalorder %s313, 3
      %s315 = scalar_select %p314, %s313, 3
      %s316 = smul.addr %s315, 8
      %s317 = scalar_lea.vmem %s5, %s316
      %s318 = smul.u32 2, %s19
      %s319 = smul.u32 2, %s19
      %p320 = scmp.lt.s32.totalorder %s319, 3
      %s321 = scalar_select %p320, %s319, 3
      %s322 = smul.addr %s321, 8
      %s323 = scalar_lea.vmem %s6, %s322
      %s324 = smul.u32 2, %s19
      %s325 = smul.u32 2, %s19
      %p326 = scmp.lt.s32.totalorder %s325, 3
      %s327 = scalar_select %p326, %s325, 3
      %s328 = smul.addr %s327, 8
      %s329 = scalar_lea.vmem %s7, %s328
      %s330 = smul.u32 2, %s19
      %v331 = vld [vmem:[%s305] sm:$0xff]
      %v332 = vld [vmem:[%s305 + $0x8] sm:$0xff]
      %v333 = vlaneseq
      %v334 = vshrl.u32 %v333, 7
      %v335 = vadd.s32 %v334, 8
      %v336 = vlaneseq
      %v337 = vand.u32 %v336, 127
      %vm338 = vcmp.le.s32.totalorder %v337, %v334
      %vm339 = vcmp.le.s32.totalorder %v337, %v335
      %342 = vrot.lane.b32.xlu0 %v331, 112
      %v343 = vpop.permute.xlu0 %342
      %344 = vrot.lane.b32.xlu0 %v332, 112
      %v345 = vpop.permute.xlu0 %344
      %v348 = vmul.f32 %v331, 0.25
      %v349 = vmul.f32 %v332, 0.25
      %v350 = vmul.f32 %v343, 0.25
      %v351 = vmul.f32 %v345, 0.25
      %352 = vrot.lane.b32.xlu0 %v331, 64
      %v353 = vpop.permute.xlu0 %352
      %354 = vrot.lane.b32.xlu0 %v332, 64
      %v355 = vpop.permute.xlu0 %354
      %vm356 = vcmask 130048
      %v358 = vsel %vm356, %v348, 0
      %v361 = vsel %vm356, %v349, 0
      %v364 = vsel %vm356, %v350, 0
      %v367 = vsel %vm356, %v351, 0
      %v369 = vsel %vm356, %v353, 0
      %v371 = vsel %vm356, %v355, 0
      %373 = vmatprep.subr.mxu0 0.0
      %374 = vmatpush1.xpose.msra.mxu0 %v369
      %375 = vmatprep.subr.mxu0 0.0
      %376 = vmatpush1.xpose.msra.mxu0 %v371
      %377 = vmatprep.subr.mxu0 0.0
      %378 = vmatpush1.xpose.msra.mxu0 0.0
      %379 = vmatprep.subr.mxu0 0.0
      %380 = vmatpush1.xpose.msra.mxu0 0.0
      %381 = vmatprep.subr.mxu0 0.0
      %382 = vmatpush1.xpose.msra.mxu0 0.0
      %383 = vmatprep.subr.mxu0 0.0
      %384 = vmatpush1.xpose.msra.mxu0 0.0
      %385 = vmatprep.subr.mxu0 0.0
      %386 = vmatpush1.xpose.msra.mxu0 0.0
      %387 = vmatprep.subr.mxu0 0.0
      %388 = vmatpush1.xpose.msra.mxu0 0.0
      %389 = vmatprep.subr.mxu0 0.0
      %390 = vmatpush1.xpose.msra.mxu0 0.0
      %391 = vmatprep.subr.mxu0 0.0
      %392 = vmatpush1.xpose.msra.mxu0 0.0
      %393 = vmatprep.subr.mxu0 0.0
      %394 = vmatpush1.xpose.msra.mxu0 0.0
      %395 = vmatprep.subr.mxu0 0.0
      %396 = vmatpush1.xpose.msra.mxu0 0.0
      %397 = vmatprep.subr.mxu0 0.0
      %398 = vmatpush1.xpose.msra.mxu0 0.0
      %399 = vmatprep.subr.mxu0 0.0
      %400 = vmatpush1.xpose.msra.mxu0 0.0
      %401 = vmatprep.subr.mxu0 0.0
      %402 = vmatpush1.xpose.msra.mxu0 0.0
      %403 = vmatprep.subr.mxu0 0.0
      %404 = vmatpush1.xpose.msra.mxu0 0.0
      %405 = vmatprep.subr.mxu0 0.0
      %406 = vmatpush1.xpose.msra.mxu0 0.0
      %407 = vmatprep.subr.mxu0 0.0
      %408 = vmatpush1.xpose.msra.mxu0 0.0
      %409 = vmatprep.subr.mxu0 0.0
      %410 = vmatpush1.xpose.msra.mxu0 0.0
      %411 = vmatprep.subr.mxu0 0.0
      %412 = vmatpush1.xpose.msra.mxu0 0.0
      %413 = vmatprep.subr.mxu0 0.0
      %414 = vmatpush1.xpose.msra.mxu0 0.0
      %415 = vmatprep.subr.mxu0 0.0
      %416 = vmatpush1.xpose.msra.mxu0 0.0
      %417 = vmatprep.subr.mxu0 0.0
      %418 = vmatpush1.xpose.msra.mxu0 0.0
      %419 = vmatprep.subr.mxu0 0.0
      %420 = vmatpush1.xpose.msra.mxu0 0.0
      %421 = vmatprep.subr.mxu0 0.0
      %422 = vmatpush1.xpose.msra.mxu0 0.0
      %423 = vmatprep.subr.mxu0 0.0
      %424 = vmatpush1.xpose.msra.mxu0 0.0
      %425 = vmatprep.subr.mxu0 0.0
      %426 = vmatpush1.xpose.msra.mxu0 0.0
      %427 = vmatprep.subr.mxu0 0.0
      %428 = vmatpush1.xpose.msra.mxu0 0.0
      %429 = vmatprep.subr.mxu0 0.0
      %430 = vmatpush1.xpose.msra.mxu0 0.0
      %431 = vmatprep.subr.mxu0 0.0
      %432 = vmatpush1.xpose.msra.mxu0 0.0
      %433 = vmatprep.subr.mxu0 0.0
      %434 = vmatpush1.xpose.msra.mxu0 0.0
      %435 = vmatprep.subr.mxu0 0.0
      %436 = vmatpush1.xpose.msra.mxu0 0.0
      %437 = vmatprep.mubr.f32.mxu0 0.0
      %438 = vmatmul.mubr.f32.gmra.mrb[0].mxu0 %v358
      %v439 = vpop.f32.mrb[0].mxu0
      %v440 = vadd.f32 0.0, %v439
      %v441 = vpop.f32.mrb[0].mxu0
      %442 = vmatprep.mubr.f32.mxu0 0.0
      %443 = vmatmul.mubr.f32.gmra.mrb[0].mxu0 %v361
      %v444 = vpop.f32.mrb[0].mxu0
      %v445 = vadd.f32 0.0, %v444
      %v446 = vpop.f32.mrb[0].mxu0
      %447 = vmatprep.mubr.f32.mxu0 0.0
      %448 = vmatmul.mubr.f32.gmra.mrb[0].mxu0 %v364
      %v449 = vpop.f32.mrb[0].mxu0
      %v450 = vadd.f32 0.0, %v449
      %v451 = vpop.f32.mrb[0].mxu0
      %452 = vmatprep.mubr.f32.mxu0 0.0
      %453 = vmatmul.mubr.f32.gmra.mrb[0].mxu0 %v367
      %v454 = vpop.f32.mrb[0].mxu0
      %v455 = vadd.f32 0.0, %v454
      %v456 = vpop.f32.mrb[0].mxu0
      %457 = vdwg.mxu0
      %v458 = vsel %vm338, %v440, -1e+30
      %v459 = vsel %vm339, %v445, -1e+30
      %v460 = vsel %vm338, %v450, -1e+30
      %v461 = vsel %vm339, %v455, -1e+30
      %v462 = vsel %vm356, %v458, -inf
      %463 = vmax.xlane.f32.xlu0 %v462
      %v464 = vpop.xlane.xlu0 %463
      %v465 = vsel %vm356, %v459, -inf
      %466 = vmax.xlane.f32.xlu0 %v465
      %v467 = vpop.xlane.xlu0 %466
      %v468 = vsel %vm356, %v460, -inf
      %469 = vmax.xlane.f32.xlu0 %v468
      %v470 = vpop.xlane.xlu0 %469
      %v471 = vsel %vm356, %v461, -inf
      %472 = vmax.xlane.f32.xlu0 %v471
      %v473 = vpop.xlane.xlu0 %472
      %v474 = vsub.f32 %v458, %v464
      %v475 = vsub.f32 %v459, %v467
      %v476 = vsub.f32 %v460, %v470
      %v477 = vsub.f32 %v461, %v473
      %v478 = vmul.f32 %v474, 1.442695
      %v479 = vpow.pop %v478
      %v480 = vmul.f32 %v475, 1.442695
      %v481 = vpow.pop %v480
      %v482 = vmul.f32 %v476, 1.442695
      %v483 = vpow.pop %v482
      %v484 = vmul.f32 %v477, 1.442695
      %v485 = vpow.pop %v484
      %v486 = vsel %vm356, %v479, 0.0
      %487 = vadd.xlane.f32.xlu0 %v486
      %v488 = vpop.xlane.xlu0 %487
      %v489 = vsel %vm356, %v481, 0.0
      %490 = vadd.xlane.f32.xlu0 %v489
      %v491 = vpop.xlane.xlu0 %490
      %v492 = vsel %vm356, %v483, 0.0
      %493 = vadd.xlane.f32.xlu0 %v492
      %v494 = vpop.xlane.xlu0 %493
      %v495 = vsel %vm356, %v485, 0.0
      %496 = vadd.xlane.f32.xlu0 %v495
      %v497 = vpop.xlane.xlu0 %496
      %v498 = vrcp.pop %v488
      %v499 = vrcp.pop %v491
      %v500 = vrcp.pop %v494
      %v501 = vrcp.pop %v497
      %v502 = vmul.f32 %v479, %v498
      %v503 = vmul.f32 %v481, %v499
      %v504 = vmul.f32 %v483, %v500
      %v505 = vmul.f32 %v485, %v501
      %506 = vrot.lane.b32.xlu0 %v331, 32
      %v507 = vpop.permute.xlu0 %506
      %508 = vrot.lane.b32.xlu0 %v332, 32
      %v509 = vpop.permute.xlu0 %508
      %v513 = vsel %vm356, %v502, 0
      %v516 = vsel %vm356, %v503, 0
      %v519 = vsel %vm356, %v504, 0
      %v522 = vsel %vm356, %v505, 0
      %524 = vmatprep.subr.mxu0 0.0
      %525 = vmatpush1.msra.mxu0 %v507
      %526 = vmatprep.subr.mxu0 0.0
      %527 = vmatpush1.msra.mxu0 %v509
      %528 = vmatprep.subr.mxu0 0.0
      %529 = vmatpush1.msra.mxu0 0.0
      %530 = vmatprep.subr.mxu0 0.0
      %531 = vmatpush1.msra.mxu0 0.0
      %532 = vmatprep.subr.mxu0 0.0
      %533 = vmatpush1.msra.mxu0 0.0
      %534 = vmatprep.subr.mxu0 0.0
      %535 = vmatpush1.msra.mxu0 0.0
      %536 = vmatprep.subr.mxu0 0.0
      %537 = vmatpush1.msra.mxu0 0.0
      %538 = vmatprep.subr.mxu0 0.0
      %539 = vmatpush1.msra.mxu0 0.0
      %540 = vmatprep.subr.mxu0 0.0
      %541 = vmatpush1.msra.mxu0 0.0
      %542 = vmatprep.subr.mxu0 0.0
      %543 = vmatpush1.msra.mxu0 0.0
      %544 = vmatprep.subr.mxu0 0.0
      %545 = vmatpush1.msra.mxu0 0.0
      %546 = vmatprep.subr.mxu0 0.0
      %547 = vmatpush1.msra.mxu0 0.0
      %548 = vmatprep.subr.mxu0 0.0
      %549 = vmatpush1.msra.mxu0 0.0
      %550 = vmatprep.subr.mxu0 0.0
      %551 = vmatpush1.msra.mxu0 0.0
      %552 = vmatprep.subr.mxu0 0.0
      %553 = vmatpush1.msra.mxu0 0.0
      %554 = vmatprep.subr.mxu0 0.0
      %555 = vmatpush1.msra.mxu0 0.0
      %556 = vmatprep.subr.mxu0 0.0
      %557 = vmatpush1.msra.mxu0 0.0
      %558 = vmatprep.subr.mxu0 0.0
      %559 = vmatpush1.msra.mxu0 0.0
      %560 = vmatprep.subr.mxu0 0.0
      %561 = vmatpush1.msra.mxu0 0.0
      %562 = vmatprep.subr.mxu0 0.0
      %563 = vmatpush1.msra.mxu0 0.0
      %564 = vmatprep.subr.mxu0 0.0
      %565 = vmatpush1.msra.mxu0 0.0
      %566 = vmatprep.subr.mxu0 0.0
      %567 = vmatpush1.msra.mxu0 0.0
      %568 = vmatprep.subr.mxu0 0.0
      %569 = vmatpush1.msra.mxu0 0.0
      %570 = vmatprep.subr.mxu0 0.0
      %571 = vmatpush1.msra.mxu0 0.0
      %572 = vmatprep.subr.mxu0 0.0
      %573 = vmatpush1.msra.mxu0 0.0
      %574 = vmatprep.subr.mxu0 0.0
      %575 = vmatpush1.msra.mxu0 0.0
      %576 = vmatprep.subr.mxu0 0.0
      %577 = vmatpush1.msra.mxu0 0.0
      %578 = vmatprep.subr.mxu0 0.0
      %579 = vmatpush1.msra.mxu0 0.0
      %580 = vmatprep.subr.mxu0 0.0
      %581 = vmatpush1.msra.mxu0 0.0
      %582 = vmatprep.subr.mxu0 0.0
      %583 = vmatpush1.msra.mxu0 0.0
      %584 = vmatprep.subr.mxu0 0.0
      %585 = vmatpush1.msra.mxu0 0.0
      %586 = vmatprep.subr.mxu0 0.0
      %587 = vmatpush1.msra.mxu0 0.0
      %588 = vmatprep.mubr.f32.mxu0 0.0
      %589 = vmatmul.mubr.f32.gmra.mrb[0].mxu0 %v513
      %v590 = vpop.f32.mrb[0].mxu0
      %v591 = vadd.f32 0.0, %v590
      %v592 = vpop.f32.mrb[0].mxu0
      %593 = vmatprep.mubr.f32.mxu0 0.0
      %594 = vmatmul.mubr.f32.gmra.mrb[0].mxu0 %v516
      %v595 = vpop.f32.mrb[0].mxu0
      %v596 = vadd.f32 0.0, %v595
      %v597 = vpop.f32.mrb[0].mxu0
      %598 = vmatprep.mubr.f32.mxu0 0.0
      %599 = vmatmul.mubr.f32.gmra.mrb[0].mxu0 %v519
      %v600 = vpop.f32.mrb[0].mxu0
      %v601 = vadd.f32 0.0, %v600
      %v602 = vpop.f32.mrb[0].mxu0
      %603 = vmatprep.mubr.f32.mxu0 0.0
      %604 = vmatmul.mubr.f32.gmra.mrb[0].mxu0 %v522
      %v605 = vpop.f32.mrb[0].mxu0
      %v606 = vadd.f32 0.0, %v605
      %v607 = vpop.f32.mrb[0].mxu0
      %608 = vdwg.mxu0
      %609 = vrot.lane.b32.xlu0 %v348, 96
      %v610 = vpop.permute.xlu0 %609
      %611 = vrot.lane.b32.xlu0 %v349, 96
      %v612 = vpop.permute.xlu0 %611
      %613 = vrot.lane.b32.xlu0 %v350, 96
      %v614 = vpop.permute.xlu0 %613
      %615 = vrot.lane.b32.xlu0 %v351, 96
      %v616 = vpop.permute.xlu0 %615
      %617 = vrot.lane.b32.xlu0 %v331, 48
      %v618 = vpop.permute.xlu0 %617
      %619 = vrot.lane.b32.xlu0 %v332, 48
      %v620 = vpop.permute.xlu0 %619
      %v621 = vsel %vm356, %v610, 0
      %v623 = vsel %vm356, %v612, 0
      %v625 = vsel %vm356, %v614, 0
      %v627 = vsel %vm356, %v616, 0
      %v629 = vsel %vm356, %v618, 0
      %v631 = vsel %vm356, %v620, 0
      %633 = vmatprep.subr.mxu0 0.0
      %634 = vmatpush1.xpose.msra.mxu0 %v629
      %635 = vmatprep.subr.mxu0 0.0
      %636 = vmatpush1.xpose.msra.mxu0 %v631
      %637 = vmatprep.subr.mxu0 0.0
      %638 = vmatpush1.xpose.msra.mxu0 0.0
      %639 = vmatprep.subr.mxu0 0.0
      %640 = vmatpush1.xpose.msra.mxu0 0.0
      %641 = vmatprep.subr.mxu0 0.0
      %642 = vmatpush1.xpose.msra.mxu0 0.0
      %643 = vmatprep.subr.mxu0 0.0
      %644 = vmatpush1.xpose.msra.mxu0 0.0
      %645 = vmatprep.subr.mxu0 0.0
      %646 = vmatpush1.xpose.msra.mxu0 0.0
      %647 = vmatprep.subr.mxu0 0.0
      %648 = vmatpush1.xpose.msra.mxu0 0.0
      %649 = vmatprep.subr.mxu0 0.0
      %650 = vmatpush1.xpose.msra.mxu0 0.0
      %651 = vmatprep.subr.mxu0 0.0
      %652 = vmatpush1.xpose.msra.mxu0 0.0
      %653 = vmatprep.subr.mxu0 0.0
      %654 = vmatpush1.xpose.msra.mxu0 0.0
      %655 = vmatprep.subr.mxu0 0.0
      %656 = vmatpush1.xpose.msra.mxu0 0.0
      %657 = vmatprep.subr.mxu0 0.0
      %658 = vmatpush1.xpose.msra.mxu0 0.0
      %659 = vmatprep.subr.mxu0 0.0
      %660 = vmatpush1.xpose.msra.mxu0 0.0
      %661 = vmatprep.subr.mxu0 0.0
      %662 = vmatpush1.xpose.msra.mxu0 0.0
      %663 = vmatprep.subr.mxu0 0.0
      %664 = vmatpush1.xpose.msra.mxu0 0.0
      %665 = vmatprep.subr.mxu0 0.0
      %666 = vmatpush1.xpose.msra.mxu0 0.0
      %667 = vmatprep.subr.mxu0 0.0
      %668 = vmatpush1.xpose.msra.mxu0 0.0
      %669 = vmatprep.subr.mxu0 0.0
      %670 = vmatpush1.xpose.msra.mxu0 0.0
      %671 = vmatprep.subr.mxu0 0.0
      %672 = vmatpush1.xpose.msra.mxu0 0.0
      %673 = vmatprep.subr.mxu0 0.0
      %674 = vmatpush1.xpose.msra.mxu0 0.0
      %675 = vmatprep.subr.mxu0 0.0
      %676 = vmatpush1.xpose.msra.mxu0 0.0
      %677 = vmatprep.subr.mxu0 0.0
      %678 = vmatpush1.xpose.msra.mxu0 0.0
      %679 = vmatprep.subr.mxu0 0.0
      %680 = vmatpush1.xpose.msra.mxu0 0.0
      %681 = vmatprep.subr.mxu0 0.0
      %682 = vmatpush1.xpose.msra.mxu0 0.0
      %683 = vmatprep.subr.mxu0 0.0
      %684 = vmatpush1.xpose.msra.mxu0 0.0
      %685 = vmatprep.subr.mxu0 0.0
      %686 = vmatpush1.xpose.msra.mxu0 0.0
      %687 = vmatprep.subr.mxu0 0.0
      %688 = vmatpush1.xpose.msra.mxu0 0.0
      %689 = vmatprep.subr.mxu0 0.0
      %690 = vmatpush1.xpose.msra.mxu0 0.0
      %691 = vmatprep.subr.mxu0 0.0
      %692 = vmatpush1.xpose.msra.mxu0 0.0
      %693 = vmatprep.subr.mxu0 0.0
      %694 = vmatpush1.xpose.msra.mxu0 0.0
      %695 = vmatprep.subr.mxu0 0.0
      %696 = vmatpush1.xpose.msra.mxu0 0.0
      %697 = vmatprep.mubr.f32.mxu0 0.0
      %698 = vmatmul.mubr.f32.gmra.mrb[0].mxu0 %v621
      %v699 = vpop.f32.mrb[0].mxu0
      %v700 = vadd.f32 0.0, %v699
      %v701 = vpop.f32.mrb[0].mxu0
      %702 = vmatprep.mubr.f32.mxu0 0.0
      %703 = vmatmul.mubr.f32.gmra.mrb[0].mxu0 %v623
      %v704 = vpop.f32.mrb[0].mxu0
      %v705 = vadd.f32 0.0, %v704
      %v706 = vpop.f32.mrb[0].mxu0
      %707 = vmatprep.mubr.f32.mxu0 0.0
      %708 = vmatmul.mubr.f32.gmra.mrb[0].mxu0 %v625
      %v709 = vpop.f32.mrb[0].mxu0
      %v710 = vadd.f32 0.0, %v709
      %v711 = vpop.f32.mrb[0].mxu0
      %712 = vmatprep.mubr.f32.mxu0 0.0
      %713 = vmatmul.mubr.f32.gmra.mrb[0].mxu0 %v627
      %v714 = vpop.f32.mrb[0].mxu0
      %v715 = vadd.f32 0.0, %v714
      %v716 = vpop.f32.mrb[0].mxu0
      %717 = vdwg.mxu0
      %v718 = vsel %vm338, %v700, -1e+30
      %v719 = vsel %vm339, %v705, -1e+30
      %v720 = vsel %vm338, %v710, -1e+30
      %v721 = vsel %vm339, %v715, -1e+30
      %v722 = vsel %vm356, %v718, -inf
      %723 = vmax.xlane.f32.xlu0 %v722
      %v724 = vpop.xlane.xlu0 %723
      %v725 = vsel %vm356, %v719, -inf
      %726 = vmax.xlane.f32.xlu0 %v725
      %v727 = vpop.xlane.xlu0 %726
      %v728 = vsel %vm356, %v720, -inf
      %729 = vmax.xlane.f32.xlu0 %v728
      %v730 = vpop.xlane.xlu0 %729
      %v731 = vsel %vm356, %v721, -inf
      %732 = vmax.xlane.f32.xlu0 %v731
      %v733 = vpop.xlane.xlu0 %732
      %v734 = vsub.f32 %v718, %v724
      %v735 = vsub.f32 %v719, %v727
      %v736 = vsub.f32 %v720, %v730
      %v737 = vsub.f32 %v721, %v733
      %v738 = vmul.f32 %v734, 1.442695
      %v739 = vpow.pop %v738
      %v740 = vmul.f32 %v735, 1.442695
      %v741 = vpow.pop %v740
      %v742 = vmul.f32 %v736, 1.442695
      %v743 = vpow.pop %v742
      %v744 = vmul.f32 %v737, 1.442695
      %v745 = vpow.pop %v744
      %v746 = vsel %vm356, %v739, 0.0
      %747 = vadd.xlane.f32.xlu0 %v746
      %v748 = vpop.xlane.xlu0 %747
      %v749 = vsel %vm356, %v741, 0.0
      %750 = vadd.xlane.f32.xlu0 %v749
      %v751 = vpop.xlane.xlu0 %750
      %v752 = vsel %vm356, %v743, 0.0
      %753 = vadd.xlane.f32.xlu0 %v752
      %v754 = vpop.xlane.xlu0 %753
      %v755 = vsel %vm356, %v745, 0.0
      %756 = vadd.xlane.f32.xlu0 %v755
      %v757 = vpop.xlane.xlu0 %756
      %v758 = vrcp.pop %v748
      %v759 = vrcp.pop %v751
      %v760 = vrcp.pop %v754
      %v761 = vrcp.pop %v757
      %v762 = vmul.f32 %v739, %v758
      %v763 = vmul.f32 %v741, %v759
      %v764 = vmul.f32 %v743, %v760
      %v765 = vmul.f32 %v745, %v761
      %766 = vrot.lane.b32.xlu0 %v331, 16
      %v767 = vpop.permute.xlu0 %766
      %768 = vrot.lane.b32.xlu0 %v332, 16
      %v769 = vpop.permute.xlu0 %768
      %v773 = vsel %vm356, %v762, 0
      %v776 = vsel %vm356, %v763, 0
      %v779 = vsel %vm356, %v764, 0
      %v782 = vsel %vm356, %v765, 0
      %784 = vmatprep.subr.mxu0 0.0
      %785 = vmatpush1.msra.mxu0 %v767
      %786 = vmatprep.subr.mxu0 0.0
      %787 = vmatpush1.msra.mxu0 %v769
      %788 = vmatprep.subr.mxu0 0.0
      %789 = vmatpush1.msra.mxu0 0.0
      %790 = vmatprep.subr.mxu0 0.0
      %791 = vmatpush1.msra.mxu0 0.0
      %792 = vmatprep.subr.mxu0 0.0
      %793 = vmatpush1.msra.mxu0 0.0
      %794 = vmatprep.subr.mxu0 0.0
      %795 = vmatpush1.msra.mxu0 0.0
      %796 = vmatprep.subr.mxu0 0.0
      %797 = vmatpush1.msra.mxu0 0.0
      %798 = vmatprep.subr.mxu0 0.0
      %799 = vmatpush1.msra.mxu0 0.0
      %800 = vmatprep.subr.mxu0 0.0
      %801 = vmatpush1.msra.mxu0 0.0
      %802 = vmatprep.subr.mxu0 0.0
      %803 = vmatpush1.msra.mxu0 0.0
      %804 = vmatprep.subr.mxu0 0.0
      %805 = vmatpush1.msra.mxu0 0.0
      %806 = vmatprep.subr.mxu0 0.0
      %807 = vmatpush1.msra.mxu0 0.0
      %808 = vmatprep.subr.mxu0 0.0
      %809 = vmatpush1.msra.mxu0 0.0
      %810 = vmatprep.subr.mxu0 0.0
      %811 = vmatpush1.msra.mxu0 0.0
      %812 = vmatprep.subr.mxu0 0.0
      %813 = vmatpush1.msra.mxu0 0.0
      %814 = vmatprep.subr.mxu0 0.0
      %815 = vmatpush1.msra.mxu0 0.0
      %816 = vmatprep.subr.mxu0 0.0
      %817 = vmatpush1.msra.mxu0 0.0
      %818 = vmatprep.subr.mxu0 0.0
      %819 = vmatpush1.msra.mxu0 0.0
      %820 = vmatprep.subr.mxu0 0.0
      %821 = vmatpush1.msra.mxu0 0.0
      %822 = vmatprep.subr.mxu0 0.0
      %823 = vmatpush1.msra.mxu0 0.0
      %824 = vmatprep.subr.mxu0 0.0
      %825 = vmatpush1.msra.mxu0 0.0
      %826 = vmatprep.subr.mxu0 0.0
      %827 = vmatpush1.msra.mxu0 0.0
      %828 = vmatprep.subr.mxu0 0.0
      %829 = vmatpush1.msra.mxu0 0.0
      %830 = vmatprep.subr.mxu0 0.0
      %831 = vmatpush1.msra.mxu0 0.0
      %832 = vmatprep.subr.mxu0 0.0
      %833 = vmatpush1.msra.mxu0 0.0
      %834 = vmatprep.subr.mxu0 0.0
      %835 = vmatpush1.msra.mxu0 0.0
      %836 = vmatprep.subr.mxu0 0.0
      %837 = vmatpush1.msra.mxu0 0.0
      %838 = vmatprep.subr.mxu0 0.0
      %839 = vmatpush1.msra.mxu0 0.0
      %840 = vmatprep.subr.mxu0 0.0
      %841 = vmatpush1.msra.mxu0 0.0
      %842 = vmatprep.subr.mxu0 0.0
      %843 = vmatpush1.msra.mxu0 0.0
      %844 = vmatprep.subr.mxu0 0.0
      %845 = vmatpush1.msra.mxu0 0.0
      %846 = vmatprep.subr.mxu0 0.0
      %847 = vmatpush1.msra.mxu0 0.0
      %848 = vmatprep.mubr.f32.mxu0 0.0
      %849 = vmatmul.mubr.f32.gmra.mrb[0].mxu0 %v773
      %v850 = vpop.f32.mrb[0].mxu0
      %v851 = vadd.f32 0.0, %v850
      %v852 = vpop.f32.mrb[0].mxu0
      %853 = vmatprep.mubr.f32.mxu0 0.0
      %854 = vmatmul.mubr.f32.gmra.mrb[0].mxu0 %v776
      %v855 = vpop.f32.mrb[0].mxu0
      %v856 = vadd.f32 0.0, %v855
      %v857 = vpop.f32.mrb[0].mxu0
      %858 = vmatprep.mubr.f32.mxu0 0.0
      %859 = vmatmul.mubr.f32.gmra.mrb[0].mxu0 %v779
      %v860 = vpop.f32.mrb[0].mxu0
      %v861 = vadd.f32 0.0, %v860
      %v862 = vpop.f32.mrb[0].mxu0
      %863 = vmatprep.mubr.f32.mxu0 0.0
      %864 = vmatmul.mubr.f32.gmra.mrb[0].mxu0 %v782
      %v865 = vpop.f32.mrb[0].mxu0
      %v866 = vadd.f32 0.0, %v865
      %v867 = vpop.f32.mrb[0].mxu0
      %868 = vdwg.mxu0
      %871 = vrot.lane.b32.xlu0 %v601, 16
      %v872 = vpop.permute.xlu0 %871
      %873 = vrot.lane.b32.xlu0 %v606, 16
      %v874 = vpop.permute.xlu0 %873
      %879 = vrot.lane.b32.xlu0 %v851, 32
      %v880 = vpop.permute.xlu0 %879
      %881 = vrot.lane.b32.xlu0 %v856, 32
      %v882 = vpop.permute.xlu0 %881
      %887 = vrot.lane.b32.xlu0 %v861, 48
      %v888 = vpop.permute.xlu0 %887
      %889 = vrot.lane.b32.xlu0 %v866, 48
      %v890 = vpop.permute.xlu0 %889
      %v893 = vsel %vm356, %v591, %v872
      %v894 = vsel %vm356, %v596, %v874
      %vm895 = vcmask 261120
      %v896 = vsel %vm895, %v893, %v880
      %v897 = vsel %vm895, %v894, %v882
      %vm898 = vcmask 392192
      %v899 = vsel %vm898, %v896, %v888
      %v900 = vsel %vm898, %v897, %v890
      %v901 = vld [vmem:[%s1] sm:$0xff]
      %v902 = vld [vmem:[%s1 + $0x8] sm:$0xff]
      %v903 = vld [vmem:[%s1 + $0x10] sm:$0xff]
      %v904 = vld [vmem:[%s1 + $0x18] sm:$0xff]
      %v905 = vld [vmem:[%s1 + $0x20] sm:$0xff]
      %v906 = vld [vmem:[%s1 + $0x28] sm:$0xff]
      %v907 = vld [vmem:[%s1 + $0x30] sm:$0xff]
      %v908 = vld [vmem:[%s1 + $0x38] sm:$0xff]
      %vm909 = vcmask 523264
      %v911 = vsel %vm909, %v899, 0
      %v914 = vsel %vm909, %v900, 0
      %916 = vmatprep.subr.mxu0 0.0
      %917 = vmatpush1.msra.mxu0 %v901
      %918 = vmatprep.subr.mxu0 0.0
      %919 = vmatpush1.msra.mxu0 %v902
      %920 = vmatprep.subr.mxu0 0.0
      %921 = vmatpush1.msra.mxu0 %v903
      %922 = vmatprep.subr.mxu0 0.0
      %923 = vmatpush1.msra.mxu0 %v904
      %924 = vmatprep.subr.mxu0 0.0
      %925 = vmatpush1.msra.mxu0 %v905
      %926 = vmatprep.subr.mxu0 0.0
      %927 = vmatpush1.msra.mxu0 %v906
      %928 = vmatprep.subr.mxu0 0.0
      %929 = vmatpush1.msra.mxu0 %v907
      %930 = vmatprep.subr.mxu0 0.0
      %931 = vmatpush1.msra.mxu0 %v908
      %932 = vmatprep.subr.mxu0 0.0
      %933 = vmatpush1.msra.mxu0 0.0
      %934 = vmatprep.subr.mxu0 0.0
      %935 = vmatpush1.msra.mxu0 0.0
      %936 = vmatprep.subr.mxu0 0.0
      %937 = vmatpush1.msra.mxu0 0.0
      %938 = vmatprep.subr.mxu0 0.0
      %939 = vmatpush1.msra.mxu0 0.0
      %940 = vmatprep.subr.mxu0 0.0
      %941 = vmatpush1.msra.mxu0 0.0
      %942 = vmatprep.subr.mxu0 0.0
      %943 = vmatpush1.msra.mxu0 0.0
      %944 = vmatprep.subr.mxu0 0.0
      %945 = vmatpush1.msra.mxu0 0.0
      %946 = vmatprep.subr.mxu0 0.0
      %947 = vmatpush1.msra.mxu0 0.0
      %948 = vmatprep.subr.mxu0 0.0
      %949 = vmatpush1.msra.mxu0 0.0
      %950 = vmatprep.subr.mxu0 0.0
      %951 = vmatpush1.msra.mxu0 0.0
      %952 = vmatprep.subr.mxu0 0.0
      %953 = vmatpush1.msra.mxu0 0.0
      %954 = vmatprep.subr.mxu0 0.0
      %955 = vmatpush1.msra.mxu0 0.0
      %956 = vmatprep.subr.mxu0 0.0
      %957 = vmatpush1.msra.mxu0 0.0
      %958 = vmatprep.subr.mxu0 0.0
      %959 = vmatpush1.msra.mxu0 0.0
      %960 = vmatprep.subr.mxu0 0.0
      %961 = vmatpush1.msra.mxu0 0.0
      %962 = vmatprep.subr.mxu0 0.0
      %963 = vmatpush1.msra.mxu0 0.0
      %964 = vmatprep.subr.mxu0 0.0
      %965 = vmatpush1.msra.mxu0 0.0
      %966 = vmatprep.subr.mxu0 0.0
      %967 = vmatpush1.msra.mxu0 0.0
      %968 = vmatprep.subr.mxu0 0.0
      %969 = vmatpush1.msra.mxu0 0.0
      %970 = vmatprep.subr.mxu0 0.0
      %971 = vmatpush1.msra.mxu0 0.0
      %972 = vmatprep.subr.mxu0 0.0
      %973 = vmatpush1.msra.mxu0 0.0
      %974 = vmatprep.subr.mxu0 0.0
      %975 = vmatpush1.msra.mxu0 0.0
      %976 = vmatprep.subr.mxu0 0.0
      %977 = vmatpush1.msra.mxu0 0.0
      %978 = vmatprep.subr.mxu0 0.0
      %979 = vmatpush1.msra.mxu0 0.0
      %980 = vmatprep.mubr.f32.mxu0 0.0
      %981 = vmatmul.mubr.f32.gmra.mrb[0].mxu0 %v911
      %v982 = vpop.f32.mrb[0].mxu0
      %v983 = vadd.f32 0.0, %v982
      %v984 = vpop.f32.mrb[0].mxu0
      %985 = vmatprep.mubr.f32.mxu0 0.0
      %986 = vmatmul.mubr.f32.gmra.mrb[0].mxu0 %v914
      %v987 = vpop.f32.mrb[0].mxu0
      %v988 = vadd.f32 0.0, %v987
      %v989 = vpop.f32.mrb[0].mxu0
      %990 = vdwg.mxu0
      %v991 = vld [vmem:[%s311] sm:$0xff]
      %v992 = vld [vmem:[%s311 + $0x8] sm:$0xff]
      %v993 = vadd.f32 %v991, %v983
      %v994 = vadd.f32 %v992, %v988
      %995 = vst.msk [vmem:[%s317] sm:$0xff] %vm909, %v993
      %996 = vst.msk [vmem:[%s317 + $0x8] sm:$0xff] %vm909, %v994
      %v997 = vmul.f32 %v993, %v993
      %v998 = vmul.f32 %v994, %v994
      %v999 = vsel %vm909, %v997, 0.0
      %1000 = vadd.xlane.f32.xlu0 %v999
      %v1001 = vpop.xlane.xlu0 %1000
      %v1002 = vsel %vm909, %v998, 0.0
      %1003 = vadd.xlane.f32.xlu0 %v1002
      %v1004 = vpop.xlane.xlu0 %1003
      %v1005 = vrcp.pop 64.0
      %v1006 = vmul.f32 %v1001, %v1005
      %v1007 = vmul.f32 %v1004, %v1005
      %v1008 = vadd.f32 %v1006, 1e-06
      %v1009 = vadd.f32 %v1007, 1e-06
      %v1010 = vrsqrt.pop %v1008
      %v1011 = vrsqrt.pop %v1009
      %v1012 = vmul.f32 %v993, %v1010
      %v1013 = vmul.f32 %v994, %v1011
      %v1014 = vld [vmem:[%s3] sm:$0x1]
      %v1016 = vlaneseq
      %v1017 = vshrl.u32 %v1016, 7
      %v1018 = vsub.s32 0, %v1017
      %v1019 = vrot.slane %v1014, %v1018
      %v1021 = vmul.f32 %v1012, %v1019
      %v1022 = vmul.f32 %v1013, %v1019
      %1023 = vst.msk [vmem:[%s323] sm:$0xff] %vm909, %v1021
      %1024 = vst.msk [vmem:[%s323 + $0x8] sm:$0xff] %vm909, %v1022
      %v1025 = vld [vmem:[%s4] sm:$0xff]
      %v1026 = vld [vmem:[%s4 + $0x8] sm:$0xff]
      %v1027 = vld [vmem:[%s4 + $0x10] sm:$0xff]
      %v1028 = vld [vmem:[%s4 + $0x18] sm:$0xff]
      %v1029 = vld [vmem:[%s4 + $0x20] sm:$0xff]
      %v1030 = vld [vmem:[%s4 + $0x28] sm:$0xff]
      %v1031 = vld [vmem:[%s4 + $0x30] sm:$0xff]
      %v1032 = vld [vmem:[%s4 + $0x38] sm:$0xff]
      %v1034 = vsel %vm909, %v1021, 0
      %v1037 = vsel %vm909, %v1022, 0
      %1039 = vmatprep.subr.mxu0 0.0
      %1040 = vmatpush1.msra.mxu0 %v1025
      %1041 = vmatprep.subr.mxu0 0.0
      %1042 = vmatpush1.msra.mxu0 %v1026
      %1043 = vmatprep.subr.mxu0 0.0
      %1044 = vmatpush1.msra.mxu0 %v1027
      %1045 = vmatprep.subr.mxu0 0.0
      %1046 = vmatpush1.msra.mxu0 %v1028
      %1047 = vmatprep.subr.mxu0 0.0
      %1048 = vmatpush1.msra.mxu0 %v1029
      %1049 = vmatprep.subr.mxu0 0.0
      %1050 = vmatpush1.msra.mxu0 %v1030
      %1051 = vmatprep.subr.mxu0 0.0
      %1052 = vmatpush1.msra.mxu0 %v1031
      %1053 = vmatprep.subr.mxu0 0.0
      %1054 = vmatpush1.msra.mxu0 %v1032
      %1055 = vmatprep.subr.mxu0 0.0
      %1056 = vmatpush1.msra.mxu0 0.0
      %1057 = vmatprep.subr.mxu0 0.0
      %1058 = vmatpush1.msra.mxu0 0.0
      %1059 = vmatprep.subr.mxu0 0.0
      %1060 = vmatpush1.msra.mxu0 0.0
      %1061 = vmatprep.subr.mxu0 0.0
      %1062 = vmatpush1.msra.mxu0 0.0
      %1063 = vmatprep.subr.mxu0 0.0
      %1064 = vmatpush1.msra.mxu0 0.0
      %1065 = vmatprep.subr.mxu0 0.0
      %1066 = vmatpush1.msra.mxu0 0.0
      %1067 = vmatprep.subr.mxu0 0.0
      %1068 = vmatpush1.msra.mxu0 0.0
      %1069 = vmatprep.subr.mxu0 0.0
      %1070 = vmatpush1.msra.mxu0 0.0
      %1071 = vmatprep.subr.mxu0 0.0
      %1072 = vmatpush1.msra.mxu0 0.0
      %1073 = vmatprep.subr.mxu0 0.0
      %1074 = vmatpush1.msra.mxu0 0.0
      %1075 = vmatprep.subr.mxu0 0.0
      %1076 = vmatpush1.msra.mxu0 0.0
      %1077 = vmatprep.subr.mxu0 0.0
      %1078 = vmatpush1.msra.mxu0 0.0
      %1079 = vmatprep.subr.mxu0 0.0
      %1080 = vmatpush1.msra.mxu0 0.0
      %1081 = vmatprep.subr.mxu0 0.0
      %1082 = vmatpush1.msra.mxu0 0.0
      %1083 = vmatprep.subr.mxu0 0.0
      %1084 = vmatpush1.msra.mxu0 0.0
      %1085 = vmatprep.subr.mxu0 0.0
      %1086 = vmatpush1.msra.mxu0 0.0
      %1087 = vmatprep.subr.mxu0 0.0
      %1088 = vmatpush1.msra.mxu0 0.0
      %1089 = vmatprep.subr.mxu0 0.0
      %1090 = vmatpush1.msra.mxu0 0.0
      %1091 = vmatprep.subr.mxu0 0.0
      %1092 = vmatpush1.msra.mxu0 0.0
      %1093 = vmatprep.subr.mxu0 0.0
      %1094 = vmatpush1.msra.mxu0 0.0
      %1095 = vmatprep.subr.mxu0 0.0
      %1096 = vmatpush1.msra.mxu0 0.0
      %1097 = vmatprep.subr.mxu0 0.0
      %1098 = vmatpush1.msra.mxu0 0.0
      %1099 = vmatprep.subr.mxu0 0.0
      %1100 = vmatpush1.msra.mxu0 0.0
      %1101 = vmatprep.subr.mxu0 0.0
      %1102 = vmatpush1.msra.mxu0 0.0
      %1103 = vmatprep.mubr.f32.mxu0 0.0
      %1104 = vmatmul.mubr.f32.gmra.mrb[0].mxu0 %v1034
      %v1105 = vpop.f32.mrb[0].mxu0
      %v1106 = vadd.f32 0.0, %v1105
      %v1107 = vpop.f32.mrb[0].mxu0
      %1108 = vmatprep.mubr.f32.mxu0 0.0
      %1109 = vmatmul.mubr.f32.gmra.mrb[0].mxu0 %v1037
      %v1110 = vpop.f32.mrb[0].mxu0
      %v1111 = vadd.f32 0.0, %v1110
      %v1112 = vpop.f32.mrb[0].mxu0
      %1113 = vdwg.mxu0
      %vm1114 = vcmask 31744
      %1115 = vst.msk [vmem:[%s329] sm:$0xff] %vm1114, %v1106
      %1116 = vst.msk [vmem:[%s329 + $0x8] sm:$0xff] %vm1114, %v1111
      %s1117 = smul.u32 2, %s19
      %p1118 = scmp.lt.s32.totalorder %s1117, 3
      %s1119 = scalar_select %p1118, %s1117, 3
      %s1120 = smul.addr %s1119, 8
      %s1121 = scalar_lea.vmem %s5, %s1120
      %s1122 = smul.u32 2, %s19
      %p1123 = scmp.lt.s32.totalorder %s1122, 3
      %s1124 = scalar_select %p1123, %s1122, 3
      %s1125 = smul.addr %s1124, 8
      %s1126 = scalar_lea.vmem %s6, %s1125
      %s1127 = smul.u32 2, %s19
      %p1128 = scmp.lt.s32.totalorder %s1127, 3
      %s1129 = scalar_select %p1128, %s1127, 3
      %s1130 = smul.addr %s1129, 8
      %s1131 = scalar_lea.vmem %s7, %s1130
      // Predicated region
      $region41: #{anemone_attention_decoder_layer.4} parent=39 // pred_check
        %p1132 = pneg %p152
      $region42: #{anemone_attention_decoder_layer.4} parent=39 // pred_check_branch
        %1134 = sbr.rel (%p1132) target = $region44
      $region43: #{anemone_attention_decoder_layer.4} parent=39 // pred_region
        %s1135 = smul.u32 2, %s19
      $region44: #{anemone_attention_decoder_layer.4} parent=39 // pred_fallthru
        _
      // Predicated region
      $region45: #{anemone_attention_decoder_layer.4} parent=39 // pred_check
        %p1136 = pneg %p178
      $region46: #{anemone_attention_decoder_layer.4} parent=39 // pred_check_branch
        %1138 = sbr.rel (%p1136) target = $region48
      $region47: #{anemone_attention_decoder_layer.4} parent=39 // pred_region
        %s1139 = smul.u32 2, %s19
      $region48: #{anemone_attention_decoder_layer.4} parent=39 // pred_fallthru
        _
      // Predicated region
      $region49: #{anemone_attention_decoder_layer.4} parent=39 // pred_check
        %p1140 = pneg %p204
      $region50: #{anemone_attention_decoder_layer.4} parent=39 // pred_check_branch
        %1142 = sbr.rel (%p1140) target = $region52
      $region51: #{anemone_attention_decoder_layer.4} parent=39 // pred_region
        %s1143 = smul.u32 2, %s19
      $region52: #{anemone_attention_decoder_layer.4} parent=39 // pred_fallthru
        _
    $region40: #{anemone_attention_decoder_layer.4} parent=5 // pred_fallthru
      _
    %p1144 = scmp.le.s32.totalorder 2, %s14
    // Predicated region
    $region53: #{anemone_attention_decoder_layer.4} parent=5 // pred_check
      %p1145 = pneg %p1144
    $region54: #{anemone_attention_decoder_layer.4} parent=5 // pred_check_branch
      %1147 = sbr.rel (%p1145) target = $region56
    $region55: #{anemone_attention_decoder_layer.4} parent=5 // pred_region
      %s1148 = ssub.s32 %s14, 2
      // Predicated region
      $region57: #{anemone_attention_decoder_layer.4} parent=55 // pred_check
        %p1149 = pneg %p158
      $region58: #{anemone_attention_decoder_layer.4} parent=55 // pred_check_branch
        %1151 = sbr.rel (%p1149) target = $region60
      $region59: #{anemone_attention_decoder_layer.4} parent=55 // pred_region
        %s1152 = smul.u32 2, %s20
        %p1153 = scmp.lt.s32.totalorder %s1152, 3
        %s1154 = scalar_select %p1153, %s1152, 3
        %s1155 = smul.addr %s1154, 8
        %s1156 = scalar_lea.vmem %s5, %s1155
      $region60: #{anemone_attention_decoder_layer.4} parent=55 // pred_fallthru
        _
      // Predicated region
      $region61: #{anemone_attention_decoder_layer.4} parent=55 // pred_check
        %p1157 = pneg %p184
      $region62: #{anemone_attention_decoder_layer.4} parent=55 // pred_check_branch
        %1159 = sbr.rel (%p1157) target = $region64
      $region63: #{anemone_attention_decoder_layer.4} parent=55 // pred_region
        %s1160 = smul.u32 2, %s20
        %p1161 = scmp.lt.s32.totalorder %s1160, 3
        %s1162 = scalar_select %p1161, %s1160, 3
        %s1163 = smul.addr %s1162, 8
        %s1164 = scalar_lea.vmem %s6, %s1163
      $region64: #{anemone_attention_decoder_layer.4} parent=55 // pred_fallthru
        _
      // Predicated region
      $region65: #{anemone_attention_decoder_layer.4} parent=55 // pred_check
        %p1165 = pneg %p210
      $region66: #{anemone_attention_decoder_layer.4} parent=55 // pred_check_branch
        %1167 = sbr.rel (%p1165) target = $region68
      $region67: #{anemone_attention_decoder_layer.4} parent=55 // pred_region
        %s1168 = smul.u32 2, %s20
        %p1169 = scmp.lt.s32.totalorder %s1168, 3
        %s1170 = scalar_select %p1169, %s1168, 3
        %s1171 = smul.addr %s1170, 8
        %s1172 = scalar_lea.vmem %s7, %s1171
      $region68: #{anemone_attention_decoder_layer.4} parent=55 // pred_fallthru
        _
    $region56: #{anemone_attention_decoder_layer.4} parent=5 // pred_fallthru
      _
  $region6: #{anemone_attention_decoder_layer.4} parent=0 // loop_footer
    %s18 = sadd.s32 1, %s14
  $region7: #{anemone_attention_decoder_layer.4} parent=0 // loop_footer_branch
    %13 = sbr.rel target = $region3
  $region8: #{anemone_attention_decoder_layer.4} parent=0 // loop_exit
    _

// kernel: anemone_attention_decoder_layer.5
$region0: #{anemone_attention_decoder_layer.5}
  #allocation0 [shape = 'u32[]', space=smem, size = 0x4, offset = 0x4, fixed_abs, tag = 'smem constant byte address 0x4 - core index']
  #allocation1 [shape = 'u32[144,128]{1,0:T(1,128)}', space=vmem, size = 0x12000, scoped, tag = 'internal scratch']
  %s0 = inlined_call_operand.vmem [shape: f32[32,64], index: 0, kind: input, shape index: {}]
  %s1 = inlined_call_operand.vmem [shape: f32[32,4], index: 1, kind: input, shape index: {}]
  %s2 = inlined_call_operand.vmem [shape: f32[64,512], index: 2, kind: input, shape index: {}]
  %s3 = inlined_call_operand.vmem [shape: f32[64,512], index: 3, kind: input, shape index: {}]
  %s4 = inlined_call_operand.vmem [shape: f32[512,64], index: 4, kind: input, shape index: {}]
  %s5 = inlined_call_operand.vmem [shape: f32[32,64], index: 5, kind: input, shape index: {}]
  %s6 = inlined_call_operand.hbm [shape: f32[32,64], index: 6, kind: output, shape index: {}]
  %s7 = sld [smem:[#allocation0]]
  $region57: #{anemone_attention_decoder_layer.5} parent=0
    _
  %s9 = ssub.s32 1, %s7
  %s10 = scalar_select 0, %s9, %s7
  $region1: #{anemone_attention_decoder_layer.5} parent=0
    #allocation2 [shape = 'u8[16384]{0}', space=vmem, size = 0x4000, scoped, tag = 'output window, operand 0']
    #allocation3 [shape = 's32[2]{0}', space=sflag, size = 0x8, scoped, tag = 'scoped memory for anemone_attention_decoder_layer.5']
    %11 = vsyncpa [#allocation3], 0
    %s12 = scalar_lea.sflag [#allocation3], 1
    %13 = vsyncpa %s12, 0
    loop: start=0, step=1, limit=4
    $region2: #{anemone_attention_decoder_layer.5} parent=1 // loop_pre_header
      _
    $region3: #{anemone_attention_decoder_layer.5} parent=1 // loop_header
      %s15 = sphi 0, %s19
      %p16 = scmp.ge.s32.totalorder %s15, 4
      %s25 = sphi 0, %s27
      %s28 = sphi 0, %s25
      %s29 = sphi 0, %s28
      %s45 = sphi 0, %s29
      %s51 = sphi 0, %s53
      %s54 = sphi 0, %s51
      %s55 = sphi 0, %s54
      %s71 = sphi 0, %s55
      %s75 = sphi 0, %s75
      %s77 = sphi 0, %s75
      %s78 = sphi 0, %s77
      %s92 = sphi 0, %s78
      %s96 = sphi 0, %s96
      %s98 = sphi 0, %s96
      %s99 = sphi 0, %s98
      %s113 = sphi 0, %s99
      %s117 = sphi 0, %s117
      %s119 = sphi 0, %s117
      %s120 = sphi 0, %s119
      %s134 = sphi 0, %s120
      %s140 = sphi 0, %s142
      %s143 = sphi 0, %s140
      %s144 = sphi 0, %s143
      %s160 = sphi 0, %s144
      %s166 = sphi 0, %s168
      %s169 = sphi 0, %s166
      %s170 = sphi 0, %s169
      %s186 = sphi 0, %s170
    $region4: #{anemone_attention_decoder_layer.5} parent=1 // loop_header_branch
      %18 = sbr.rel (%p16) target = $region8
    $region5: #{anemone_attention_decoder_layer.5} parent=1 // loop_body
      %s20 = ssub.s32 %s15, 1
      %s21 = ssub.s32 %s15, 2
      %s22 = sadd.s32 %s15, 1
      %s23 = ssub.s32 %s15, %s22
      %p24 = scmp.eq.s32.totalorder %s23, 0
      %s26 = sadd.s32 %s25, 1
      %s27 = scalar_select %p24, %s25, %s26
      %p30 = pneg %p24
      %p31 = scmp.eq.s32.totalorder %s15, 1
      %p32 = por %p30, %p31
      %p33 = scmp.ne.s32.totalorder %s25, %s28
      %p34 = scmp.eq.s32.totalorder %s15, 0
      %p35 = por %p33, %p34
      %p36 = scmp.ne.s32.totalorder %s25, %s28
      %p37 = scmp.eq.s32.totalorder %s20, 1
      %p38 = por %p36, %p37
      %p39 = scmp.ne.s32.totalorder %s28, %s29
      %p40 = scmp.eq.s32.totalorder %s20, 0
      %p41 = por %p39, %p40
      %p42 = scmp.ne.s32.totalorder %s28, %s29
      %p43 = scmp.eq.s32.totalorder %s21, 1
      %p44 = por %p42, %p43
      %p46 = scmp.ne.s32.totalorder %s29, %s45
      %p47 = scmp.eq.s32.totalorder %s21, 0
      %p48 = por %p46, %p47
      %s49 = ssub.s32 %s15, %s22
      %p50 = scmp.eq.s32.totalorder %s49, 0
      %s52 = sadd.s32 %s51, 1
      %s53 = scalar_select %p50, %s51, %s52
      %p56 = pneg %p50
      %p57 = scmp.eq.s32.totalorder %s15, 1
      %p58 = por %p56, %p57
      %p59 = scmp.ne.s32.totalorder %s51, %s54
      %p60 = scmp.eq.s32.totalorder %s15, 0
      %p61 = por %p59, %p60
      %p62 = scmp.ne.s32.totalorder %s51, %s54
      %p63 = scmp.eq.s32.totalorder %s20, 1
      %p64 = por %p62, %p63
      %p65 = scmp.ne.s32.totalorder %s54, %s55
      %p66 = scmp.eq.s32.totalorder %s20, 0
      %p67 = por %p65, %p66
      %p68 = scmp.ne.s32.totalorder %s54, %s55
      %p69 = scmp.eq.s32.totalorder %s21, 1
      %p70 = por %p68, %p69
      %p72 = scmp.ne.s32.totalorder %s55, %s71
      %p73 = scmp.eq.s32.totalorder %s21, 0
      %p74 = por %p72, %p73
      %s76 = sadd.s32 %s75, 1
      %p79 = scmp.eq.s32.totalorder %s15, 1
      %p80 = scmp.ne.s32.totalorder %s75, %s77
      %p81 = scmp.eq.s32.totalorder %s15, 0
      %p82 = por %p80, %p81
      %p83 = scmp.ne.s32.totalorder %s75, %s77
      %p84 = scmp.eq.s32.totalorder %s20, 1
      %p85 = por %p83, %p84
      %p86 = scmp.ne.s32.totalorder %s77, %s78
      %p87 = scmp.eq.s32.totalorder %s20, 0
      %p88 = por %p86, %p87
      %p89 = scmp.ne.s32.totalorder %s77, %s78
      %p90 = scmp.eq.s32.totalorder %s21, 1
      %p91 = por %p89, %p90
      %p93 = scmp.ne.s32.totalorder %s78, %s92
      %p94 = scmp.eq.s32.totalorder %s21, 0
      %p95 = por %p93, %p94
      %s97 = sadd.s32 %s96, 1
      %p100 = scmp.eq.s32.totalorder %s15, 1
      %p101 = scmp.ne.s32.totalorder %s96, %s98
      %p102 = scmp.eq.s32.totalorder %s15, 0
      %p103 = por %p101, %p102
      %p104 = scmp.ne.s32.totalorder %s96, %s98
      %p105 = scmp.eq.s32.totalorder %s20, 1
      %p106 = por %p104, %p105
      %p107 = scmp.ne.s32.totalorder %s98, %s99
      %p108 = scmp.eq.s32.totalorder %s20, 0
      %p109 = por %p107, %p108
      %p110 = scmp.ne.s32.totalorder %s98, %s99
      %p111 = scmp.eq.s32.totalorder %s21, 1
      %p112 = por %p110, %p111
      %p114 = scmp.ne.s32.totalorder %s99, %s113
      %p115 = scmp.eq.s32.totalorder %s21, 0
      %p116 = por %p114, %p115
      %s118 = sadd.s32 %s117, 1
      %p121 = scmp.eq.s32.totalorder %s15, 1
      %p122 = scmp.ne.s32.totalorder %s117, %s119
      %p123 = scmp.eq.s32.totalorder %s15, 0
      %p124 = por %p122, %p123
      %p125 = scmp.ne.s32.totalorder %s117, %s119
      %p126 = scmp.eq.s32.totalorder %s20, 1
      %p127 = por %p125, %p126
      %p128 = scmp.ne.s32.totalorder %s119, %s120
      %p129 = scmp.eq.s32.totalorder %s20, 0
      %p130 = por %p128, %p129
      %p131 = scmp.ne.s32.totalorder %s119, %s120
      %p132 = scmp.eq.s32.totalorder %s21, 1
      %p133 = por %p131, %p132
      %p135 = scmp.ne.s32.totalorder %s120, %s134
      %p136 = scmp.eq.s32.totalorder %s21, 0
      %p137 = por %p135, %p136
      %s138 = ssub.s32 %s15, %s22
      %p139 = scmp.eq.s32.totalorder %s138, 0
      %s141 = sadd.s32 %s140, 1
      %s142 = scalar_select %p139, %s140, %s141
      %p145 = pneg %p139
      %p146 = scmp.eq.s32.totalorder %s15, 1
      %p147 = por %p145, %p146
      %p148 = scmp.ne.s32.totalorder %s140, %s143
      %p149 = scmp.eq.s32.totalorder %s15, 0
      %p150 = por %p148, %p149
      %p151 = scmp.ne.s32.totalorder %s140, %s143
      %p152 = scmp.eq.s32.totalorder %s20, 1
      %p153 = por %p151, %p152
      %p154 = scmp.ne.s32.totalorder %s143, %s144
      %p155 = scmp.eq.s32.totalorder %s20, 0
      %p156 = por %p154, %p155
      %p157 = scmp.ne.s32.totalorder %s143, %s144
      %p158 = scmp.eq.s32.totalorder %s21, 1
      %p159 = por %p157, %p158
      %p161 = scmp.ne.s32.totalorder %s144, %s160
      %p162 = scmp.eq.s32.totalorder %s21, 0
      %p163 = por %p161, %p162
      %s164 = ssub.s32 %s15, %s22
      %p165 = scmp.eq.s32.totalorder %s164, 0
      %s167 = sadd.s32 %s166, 1
      %s168 = scalar_select %p165, %s166, %s167
      %p171 = pneg %p165
      %p172 = scmp.eq.s32.totalorder %s15, 1
      %p173 = por %p171, %p172
      %p174 = scmp.ne.s32.totalorder %s166, %s169
      %p175 = scmp.eq.s32.totalorder %s15, 0
      %p176 = por %p174, %p175
      %p177 = scmp.ne.s32.totalorder %s166, %s169
      %p178 = scmp.eq.s32.totalorder %s20, 1
      %p179 = por %p177, %p178
      %p180 = scmp.ne.s32.totalorder %s169, %s170
      %p181 = scmp.eq.s32.totalorder %s20, 0
      %p182 = por %p180, %p181
      %p183 = scmp.ne.s32.totalorder %s169, %s170
      %p184 = scmp.eq.s32.totalorder %s21, 1
      %p185 = por %p183, %p184
      %p187 = scmp.ne.s32.totalorder %s170, %s186
      %p188 = scmp.eq.s32.totalorder %s21, 0
      %p189 = por %p187, %p188
      %p190 = scmp.le.s32.totalorder 1, %s15
      %p191 = scmp.lt.s32.totalorder %s15, 3
      %p192 = pnand %p190, %p191
      %p193 = pneg %p192
      // Predicated region
      $region9: #{anemone_attention_decoder_layer.5} parent=5 // pred_check
        _
      $region10: #{anemone_attention_decoder_layer.5} parent=5 // pred_check_branch
        %195 = sbr.rel (%p192) target = $region12
      $region11: #{anemone_attention_decoder_layer.5} parent=5 // pred_region
        %s196 = ssub.s32 %s15, 1
        // Predicated region
        $region13: #{anemone_attention_decoder_layer.5} parent=11 // pred_check
          %p197 = pneg %p88
        $region14: #{anemone_attention_decoder_layer.5} parent=11 // pred_check_branch
          %199 = sbr.rel (%p197) target = $region16
        $region15: #{anemone_attention_decoder_layer.5} parent=11 // pred_region
          _
        $region16: #{anemone_attention_decoder_layer.5} parent=11 // pred_fallthru
          _
        // Predicated region
        $region17: #{anemone_attention_decoder_layer.5} parent=11 // pred_check
          %p200 = pneg %p109
        $region18: #{anemone_attention_decoder_layer.5} parent=11 // pred_check_branch
          %202 = sbr.rel (%p200) target = $region20
        $region19: #{anemone_attention_decoder_layer.5} parent=11 // pred_region
          _
        $region20: #{anemone_attention_decoder_layer.5} parent=11 // pred_fallthru
          _
        // Predicated region
        $region21: #{anemone_attention_decoder_layer.5} parent=11 // pred_check
          %p203 = pneg %p130
        $region22: #{anemone_attention_decoder_layer.5} parent=11 // pred_check_branch
          %205 = sbr.rel (%p203) target = $region24
        $region23: #{anemone_attention_decoder_layer.5} parent=11 // pred_region
          _
        $region24: #{anemone_attention_decoder_layer.5} parent=11 // pred_fallthru
          _
      $region12: #{anemone_attention_decoder_layer.5} parent=5 // pred_fallthru
        _
      %p206 = scmp.lt.s32.totalorder %s15, 2
      // Predicated region
      $region25: #{anemone_attention_decoder_layer.5} parent=5 // pred_check
        %p207 = pneg %p206
      $region26: #{anemone_attention_decoder_layer.5} parent=5 // pred_check_branch
        %209 = sbr.rel (%p207) target = $region28
      $region27: #{anemone_attention_decoder_layer.5} parent=5 // pred_region
        // Predicated region
        $region29: #{anemone_attention_decoder_layer.5} parent=27 // pred_check
          %p210 = pneg %p35
        $region30: #{anemone_attention_decoder_layer.5} parent=27 // pred_check_branch
          %212 = sbr.rel (%p210) target = $region32
        $region31: #{anemone_attention_decoder_layer.5} parent=27 // pred_region
          %s213 = smul.u32 2, %s15
          %p214 = scmp.lt.s32.totalorder %s213, 3
          %s215 = scalar_select %p214, %s213, 3
          %s216 = smul.addr %s215, 8
          %s217 = scalar_lea.vmem %s0, %s216
          %s218 = smul.u32 2, %s15
        $region32: #{anemone_attention_decoder_layer.5} parent=27 // pred_fallthru
          _
        // Predicated region
        $region33: #{anemone_attention_decoder_layer.5} parent=27 // pred_check
          %p219 = pneg %p61
        $region34: #{anemone_attention_decoder_layer.5} parent=27 // pred_check_branch
          %221 = sbr.rel (%p219) target = $region36
        $region35: #{anemone_attention_decoder_layer.5} parent=27 // pred_region
          %s222 = smul.u32 2, %s15
          %p223 = scmp.lt.s32.totalorder %s222, 3
          %s224 = scalar_select %p223, %s222, 3
          %s225 = smul.addr %s224, 8
          %s226 = scalar_lea.vmem %s1, %s225
          %s227 = smul.u32 2, %s15
        $region36: #{anemone_attention_decoder_layer.5} parent=27 // pred_fallthru
          _
        // Predicated region
        $region37: #{anemone_attention_decoder_layer.5} parent=27 // pred_check
          %p228 = pneg %p150
        $region38: #{anemone_attention_decoder_layer.5} parent=27 // pred_check_branch
          %230 = sbr.rel (%p228) target = $region40
        $region39: #{anemone_attention_decoder_layer.5} parent=27 // pred_region
          %s231 = smul.u32 2, %s15
          %p232 = scmp.lt.s32.totalorder %s231, 3
          %s233 = scalar_select %p232, %s231, 3
          %s234 = smul.addr %s233, 8
          %s235 = scalar_lea.vmem %s5, %s234
          %s236 = smul.u32 2, %s15
        $region40: #{anemone_attention_decoder_layer.5} parent=27 // pred_fallthru
          _
      $region28: #{anemone_attention_decoder_layer.5} parent=5 // pred_fallthru
        _
      %p237 = scmp.le.s32.totalorder 1, %s15
      %p238 = scmp.lt.s32.totalorder %s15, 3
      %p239 = pnand %p237, %p238
      %p240 = pneg %p239
      // Predicated region
      $region41: #{anemone_attention_decoder_layer.5} parent=5 // pred_check
        _
      $region42: #{anemone_attention_decoder_layer.5} parent=5 // pred_check_branch
        %242 = sbr.rel (%p239) target = $region44
      $region43: #{anemone_attention_decoder_layer.5} parent=5 // pred_region
        %s243 = ssub.s32 %s15, 1
        %s244 = smul.u32 2, %s20
        %p245 = scmp.lt.s32.totalorder %s244, 3
        %s246 = scalar_select %p245, %s244, 3
        %s247 = smul.addr %s246, 8
        %s248 = scalar_lea.vmem %s0, %s247
        %p249 = pneg %p41
        %p250 = pneg %p38
        %s251 = smul.u32 2, %s20
        %p252 = scmp.lt.s32.totalorder %s251, 3
        %s253 = scalar_select %p252, %s251, 3
        %s254 = smul.addr %s253, 8
        %s255 = scalar_lea.vmem %s1, %s254
        %p256 = pneg %p67
        %p257 = pneg %p64
        %p258 = pneg %p88
        %p259 = pneg %p85
        %p260 = pneg %p109
        %p261 = pneg %p106
        %p262 = pneg %p130
        %p263 = pneg %p127
        %s264 = smul.u32 2, %s20
        %p265 = scmp.lt.s32.totalorder %s264, 3
        %s266 = scalar_select %p265, %s264, 3
        %s267 = smul.addr %s266, 8
        %s268 = scalar_lea.vmem %s5, %s267
        %p269 = pneg %p156
        %p270 = pneg %p153
        %p271 = pneg %p182
        %p272 = pneg %p179
        %s273 = sand.u32 %s169, 1
        %s274 = scalar_lea.sflag [#allocation3], %s273
        %s275 = sand.u32 %s169, 1
        %s276 = smul.addr %s275, 16
        %s277 = scalar_lea.vmem [#allocation2], %s276
        %s278 = smul.u32 2, %s20
        %p279 = scmp.lt.s32.totalorder %s278, 3
        %s280 = scalar_select %p279, %s278, 3
        %s281 = smul.addr %s280, 8
        %s282 = scalar_lea.vmem %s0, %s281
        %s283 = smul.u32 2, %s20
        %s284 = smul.u32 2, %s20
        %p285 = scmp.lt.s32.totalorder %s284, 3
        %s286 = scalar_select %p285, %s284, 3
        %s287 = smul.addr %s286, 8
        %s288 = scalar_lea.vmem %s1, %s287
        %s289 = smul.u32 2, %s20
        %s290 = smul.u32 2, %s20
        %p291 = scmp.lt.s32.totalorder %s290, 3
        %s292 = scalar_select %p291, %s290, 3
        %s293 = smul.addr %s292, 8
        %s294 = scalar_lea.vmem %s5, %s293
        %s295 = smul.u32 2, %s20
        %s296 = smul.u32 2, %s20
        %v297 = vld [vmem:[%s282] sm:$0xff]
        %v298 = vld [vmem:[%s282 + $0x8] sm:$0xff]
        %v299 = vld [vmem:[%s2] sm:$0xff]
        %v300 = vld [vmem:[%s2 + $0x8] sm:$0xff]
        %v301 = vld [vmem:[%s2 + $0x10] sm:$0xff]
        %v302 = vld [vmem:[%s2 + $0x18] sm:$0xff]
        %v303 = vld [vmem:[%s2 + $0x20] sm:$0xff]
        %v304 = vld [vmem:[%s2 + $0x28] sm:$0xff]
        %v305 = vld [vmem:[%s2 + $0x30] sm:$0xff]
        %v306 = vld [vmem:[%s2 + $0x38] sm:$0xff]
        %v307 = vld [vmem:[%s2 + $0x40] sm:$0xff]
        %v308 = vld [vmem:[%s2 + $0x48] sm:$0xff]
        %v309 = vld [vmem:[%s2 + $0x50] sm:$0xff]
        %v310 = vld [vmem:[%s2 + $0x58] sm:$0xff]
        %v311 = vld [vmem:[%s2 + $0x60] sm:$0xff]
        %v312 = vld [vmem:[%s2 + $0x68] sm:$0xff]
        %v313 = vld [vmem:[%s2 + $0x70] sm:$0xff]
        %v314 = vld [vmem:[%s2 + $0x78] sm:$0xff]
        %v315 = vld [vmem:[%s2 + $0x80] sm:$0xff]
        %v316 = vld [vmem:[%s2 + $0x88] sm:$0xff]
        %v317 = vld [vmem:[%s2 + $0x90] sm:$0xff]
        %v318 = vld [vmem:[%s2 + $0x98] sm:$0xff]
        %v319 = vld [vmem:[%s2 + $0xa0] sm:$0xff]
        %v320 = vld [vmem:[%s2 + $0xa8] sm:$0xff]
        %v321 = vld [vmem:[%s2 + $0xb0] sm:$0xff]
        %v322 = vld [vmem:[%s2 + $0xb8] sm:$0xff]
        %v323 = vld [vmem:[%s2 + $0xc0] sm:$0xff]
        %v324 = vld [vmem:[%s2 + $0xc8] sm:$0xff]
        %v325 = vld [vmem:[%s2 + $0xd0] sm:$0xff]
        %v326 = vld [vmem:[%s2 + $0xd8] sm:$0xff]
        %v327 = vld [vmem:[%s2 + $0xe0] sm:$0xff]
        %v328 = vld [vmem:[%s2 + $0xe8] sm:$0xff]
        %v329 = vld [vmem:[%s2 + $0xf0] sm:$0xff]
        %v330 = vld [vmem:[%s2 + $0xf8] sm:$0xff]
        %vm331 = vcmask 523264
        %v333 = vsel %vm331, %v297, 0
        %v336 = vsel %vm331, %v298, 0
        %338 = vmatprep.subr.mxu0 %v300
        %339 = vmatpush1.msra.mxu0 %v299
        %340 = vmatprep.subr.mxu0 %v304
        %341 = vmatpush1.msra.mxu0 %v303
        %342 = vmatprep.subr.mxu0 %v308
        %343 = vmatpush1.msra.mxu0 %v307
        %344 = vmatprep.subr.mxu0 %v312
        %345 = vmatpush1.msra.mxu0 %v311
        %346 = vmatprep.subr.mxu0 %v316
        %347 = vmatpush1.msra.mxu0 %v315
        %348 = vmatprep.subr.mxu0 %v320
        %349 = vmatpush1.msra.mxu0 %v319
        %350 = vmatprep.subr.mxu0 %v324
        %351 = vmatpush1.msra.mxu0 %v323
        %352 = vmatprep.subr.mxu0 %v328
        %353 = vmatpush1.msra.mxu0 %v327
        %354 = vmatprep.subr.mxu0 0.0
        %355 = vmatpush1.msra.mxu0 0.0
        %356 = vmatprep.subr.mxu0 0.0
        %357 = vmatpush1.msra.mxu0 0.0
        %358 = vmatprep.subr.mxu0 0.0
        %359 = vmatpush1.msra.mxu0 0.0
        %360 = vmatprep.subr.mxu0 0.0
        %361 = vmatpush1.msra.mxu0 0.0
        %362 = vmatprep.subr.mxu0 0.0
        %363 = vmatpush1.msra.mxu0 0.0
        %364 = vmatprep.subr.mxu0 0.0
        %365 = vmatpush1.msra.mxu0 0.0
        %366 = vmatprep.subr.mxu0 0.0
        %367 = vmatpush1.msra.mxu0 0.0
        %368 = vmatprep.subr.mxu0 0.0
        %369 = vmatpush1.msra.mxu0 0.0
        %370 = vmatprep.subr.mxu0 0.0
        %371 = vmatpush1.msra.mxu0 0.0
        %372 = vmatprep.subr.mxu0 0.0
        %373 = vmatpush1.msra.mxu0 0.0
        %374 = vmatprep.subr.mxu0 0.0
        %375 = vmatpush1.msra.mxu0 0.0
        %376 = vmatprep.subr.mxu0 0.0
        %377 = vmatpush1.msra.mxu0 0.0
        %378 = vmatprep.subr.mxu0 0.0
        %379 = vmatpush1.msra.mxu0 0.0
        %380 = vmatprep.subr.mxu0 0.0
        %381 = vmatpush1.msra.mxu0 0.0
        %382 = vmatprep.subr.mxu0 0.0
        %383 = vmatpush1.msra.mxu0 0.0
        %384 = vmatprep.subr.mxu0 0.0
        %385 = vmatpush1.msra.mxu0 0.0
        %386 = vmatprep.subr.mxu0 0.0
        %387 = vmatpush1.msra.mxu0 0.0
        %388 = vmatprep.subr.mxu0 0.0
        %389 = vmatpush1.msra.mxu0 0.0
        %390 = vmatprep.subr.mxu0 0.0
        %391 = vmatpush1.msra.mxu0 0.0
        %392 = vmatprep.subr.mxu0 0.0
        %393 = vmatpush1.msra.mxu0 0.0
        %394 = vmatprep.subr.mxu0 0.0
        %395 = vmatpush1.msra.mxu0 0.0
        %396 = vmatprep.subr.mxu0 0.0
        %397 = vmatpush1.msra.mxu0 0.0
        %398 = vmatprep.subr.mxu0 0.0
        %399 = vmatpush1.msra.mxu0 0.0
        %400 = vmatprep.subr.mxu0 0.0
        %401 = vmatpush1.msra.mxu0 0.0
        %402 = vmatprep.mubr.f32.mxu0 0.0
        %403 = vmatmul.mubr.f32.gmra.mrb[0].mxu0 %v333
        %v404 = vpop.f32.mrb[0].mxu0
        %v405 = vadd.f32 0.0, %v404
        %v406 = vpop.f32.mrb[0].mxu0
        %v407 = vadd.f32 0.0, %v406
        %408 = vmatprep.mubr.f32.mxu0 0.0
        %409 = vmatmul.mubr.f32.gmra.mrb[0].mxu0 %v336
        %v410 = vpop.f32.mrb[0].mxu0
        %v411 = vadd.f32 0.0, %v410
        %v412 = vpop.f32.mrb[0].mxu0
        %v413 = vadd.f32 0.0, %v412
        %414 = vdwg.mxu0
        %415 = vmatprep.subr.mxu0 %v302
        %416 = vmatpush1.msra.mxu0 %v301
        %417 = vmatprep.subr.mxu0 %v306
        %418 = vmatpush1.msra.mxu0 %v305
        %419 = vmatprep.subr.mxu0 %v310
        %420 = vmatpush1.msra.mxu0 %v309
        %421 = vmatprep.subr.mxu0 %v314
        %422 = vmatpush1.msra.mxu0 %v313
        %423 = vmatprep.subr.mxu0 %v318
        %424 = vmatpush1.msra.mxu0 %v317
        %425 = vmatprep.subr.mxu0 %v322
        %426 = vmatpush1.msra.mxu0 %v321
        %427 = vmatprep.subr.mxu0 %v326
        %428 = vmatpush1.msra.mxu0 %v325
        %429 = vmatprep.subr.mxu0 %v330
        %430 = vmatpush1.msra.mxu0 %v329
        %431 = vmatprep.subr.mxu0 0.0
        %432 = vmatpush1.msra.mxu0 0.0
        %433 = vmatprep.subr.mxu0 0.0
        %434 = vmatpush1.msra.mxu0 0.0
        %435 = vmatprep.subr.mxu0 0.0
        %436 = vmatpush1.msra.mxu0 0.0
        %437 = vmatprep.subr.mxu0 0.0
        %438 = vmatpush1.msra.mxu0 0.0
        %439 = vmatprep.subr.mxu0 0.0
        %440 = vmatpush1.msra.mxu0 0.0
        %441 = vmatprep.subr.mxu0 0.0
        %442 = vmatpush1.msra.mxu0 0.0
        %443 = vmatprep.subr.mxu0 0.0
        %444 = vmatpush1.msra.mxu0 0.0
        %445 = vmatprep.subr.mxu0 0.0
        %446 = vmatpush1.msra.mxu0 0.0
        %447 = vmatprep.subr.mxu0 0.0
        %448 = vmatpush1.msra.mxu0 0.0
        %449 = vmatprep.subr.mxu0 0.0
        %450 = vmatpush1.msra.mxu0 0.0
        %451 = vmatprep.subr.mxu0 0.0
        %452 = vmatpush1.msra.mxu0 0.0
        %453 = vmatprep.subr.mxu0 0.0
        %454 = vmatpush1.msra.mxu0 0.0
        %455 = vmatprep.subr.mxu0 0.0
        %456 = vmatpush1.msra.mxu0 0.0
        %457 = vmatprep.subr.mxu0 0.0
        %458 = vmatpush1.msra.mxu0 0.0
        %459 = vmatprep.subr.mxu0 0.0
        %460 = vmatpush1.msra.mxu0 0.0
        %461 = vmatprep.subr.mxu0 0.0
        %462 = vmatpush1.msra.mxu0 0.0
        %463 = vmatprep.subr.mxu0 0.0
        %464 = vmatpush1.msra.mxu0 0.0
        %465 = vmatprep.subr.mxu0 0.0
        %466 = vmatpush1.msra.mxu0 0.0
        %467 = vmatprep.subr.mxu0 0.0
        %468 = vmatpush1.msra.mxu0 0.0
        %469 = vmatprep.subr.mxu0 0.0
        %470 = vmatpush1.msra.mxu0 0.0
        %471 = vmatprep.subr.mxu0 0.0
        %472 = vmatpush1.msra.mxu0 0.0
        %473 = vmatprep.subr.mxu0 0.0
        %474 = vmatpush1.msra.mxu0 0.0
        %475 = vmatprep.subr.mxu0 0.0
        %476 = vmatpush1.msra.mxu0 0.0
        %477 = vmatprep.subr.mxu0 0.0
        %478 = vmatpush1.msra.mxu0 0.0
        %479 = vmatprep.mubr.f32.mxu0 0.0
        %480 = vmatmul.mubr.f32.gmra.mrb[0].mxu0 %v333
        %v481 = vpop.f32.mrb[0].mxu0
        %v482 = vadd.f32 0.0, %v481
        %v483 = vpop.f32.mrb[0].mxu0
        %v484 = vadd.f32 0.0, %v483
        %485 = vmatprep.mubr.f32.mxu0 0.0
        %486 = vmatmul.mubr.f32.gmra.mrb[0].mxu0 %v336
        %v487 = vpop.f32.mrb[0].mxu0
        %v488 = vadd.f32 0.0, %v487
        %v489 = vpop.f32.mrb[0].mxu0
        %v490 = vadd.f32 0.0, %v489
        %491 = vdwg.mxu0
        %v492 = vld [vmem:[%s3] sm:$0xff]
        %v493 = vld [vmem:[%s3 + $0x8] sm:$0xff]
        %v494 = vld [vmem:[%s3 + $0x10] sm:$0xff]
        %v495 = vld [vmem:[%s3 + $0x18] sm:$0xff]
        %v496 = vld [vmem:[%s3 + $0x20] sm:$0xff]
        %v497 = vld [vmem:[%s3 + $0x28] sm:$0xff]
        %v498 = vld [vmem:[%s3 + $0x30] sm:$0xff]
        %v499 = vld [vmem:[%s3 + $0x38] sm:$0xff]
        %v500 = vld [vmem:[%s3 + $0x40] sm:$0xff]
        %v501 = vld [vmem:[%s3 + $0x48] sm:$0xff]
        %v502 = vld [vmem:[%s3 + $0x50] sm:$0xff]
        %v503 = vld [vmem:[%s3 + $0x58] sm:$0xff]
        %v504 = vld [vmem:[%s3 + $0x60] sm:$0xff]
        %v505 = vld [vmem:[%s3 + $0x68] sm:$0xff]
        %v506 = vld [vmem:[%s3 + $0x70] sm:$0xff]
        %v507 = vld [vmem:[%s3 + $0x78] sm:$0xff]
        %v508 = vld [vmem:[%s3 + $0x80] sm:$0xff]
        %v509 = vld [vmem:[%s3 + $0x88] sm:$0xff]
        %v510 = vld [vmem:[%s3 + $0x90] sm:$0xff]
        %v511 = vld [vmem:[%s3 + $0x98] sm:$0xff]
        %v512 = vld [vmem:[%s3 + $0xa0] sm:$0xff]
        %v513 = vld [vmem:[%s3 + $0xa8] sm:$0xff]
        %v514 = vld [vmem:[%s3 + $0xb0] sm:$0xff]
        %v515 = vld [vmem:[%s3 + $0xb8] sm:$0xff]
        %v516 = vld [vmem:[%s3 + $0xc0] sm:$0xff]
        %v517 = vld [vmem:[%s3 + $0xc8] sm:$0xff]
        %v518 = vld [vmem:[%s3 + $0xd0] sm:$0xff]
        %v519 = vld [vmem:[%s3 + $0xd8] sm:$0xff]
        %v520 = vld [vmem:[%s3 + $0xe0] sm:$0xff]
        %v521 = vld [vmem:[%s3 + $0xe8] sm:$0xff]
        %v522 = vld [vmem:[%s3 + $0xf0] sm:$0xff]
        %v523 = vld [vmem:[%s3 + $0xf8] sm:$0xff]
        %524 = vmatprep.subr.mxu0 %v493
        %525 = vmatpush1.msra.mxu0 %v492
        %526 = vmatprep.subr.mxu0 %v497
        %527 = vmatpush1.msra.mxu0 %v496
        %528 = vmatprep.subr.mxu0 %v501
        %529 = vmatpush1.msra.mxu0 %v500
        %530 = vmatprep.subr.mxu0 %v505
        %531 = vmatpush1.msra.mxu0 %v504
        %532 = vmatprep.subr.mxu0 %v509
        %533 = vmatpush1.msra.mxu0 %v508
        %534 = vmatprep.subr.mxu0 %v513
        %535 = vmatpush1.msra.mxu0 %v512
        %536 = vmatprep.subr.mxu0 %v517
        %537 = vmatpush1.msra.mxu0 %v516
        %538 = vmatprep.subr.mxu0 %v521
        %539 = vmatpush1.msra.mxu0 %v520
        %540 = vmatprep.subr.mxu0 0.0
        %541 = vmatpush1.msra.mxu0 0.0
        %542 = vmatprep.subr.mxu0 0.0
        %543 = vmatpush1.msra.mxu0 0.0
        %544 = vmatprep.subr.mxu0 0.0
        %545 = vmatpush1.msra.mxu0 0.0
        %546 = vmatprep.subr.mxu0 0.0
        %547 = vmatpush1.msra.mxu0 0.0
        %548 = vmatprep.subr.mxu0 0.0
        %549 = vmatpush1.msra.mxu0 0.0
        %550 = vmatprep.subr.mxu0 0.0
        %551 = vmatpush1.msra.mxu0 0.0
        %552 = vmatprep.subr.mxu0 0.0
        %553 = vmatpush1.msra.mxu0 0.0
        %554 = vmatprep.subr.mxu0 0.0
        %555 = vmatpush1.msra.mxu0 0.0
        %556 = vmatprep.subr.mxu0 0.0
        %557 = vmatpush1.msra.mxu0 0.0
        %558 = vmatprep.subr.mxu0 0.0
        %559 = vmatpush1.msra.mxu0 0.0
        %560 = vmatprep.subr.mxu0 0.0
        %561 = vmatpush1.msra.mxu0 0.0
        %562 = vmatprep.subr.mxu0 0.0
        %563 = vmatpush1.msra.mxu0 0.0
        %564 = vmatprep.subr.mxu0 0.0
        %565 = vmatpush1.msra.mxu0 0.0
        %566 = vmatprep.subr.mxu0 0.0
        %567 = vmatpush1.msra.mxu0 0.0
        %568 = vmatprep.subr.mxu0 0.0
        %569 = vmatpush1.msra.mxu0 0.0
        %570 = vmatprep.subr.mxu0 0.0
        %571 = vmatpush1.msra.mxu0 0.0
        %572 = vmatprep.subr.mxu0 0.0
        %573 = vmatpush1.msra.mxu0 0.0
        %574 = vmatprep.subr.mxu0 0.0
        %575 = vmatpush1.msra.mxu0 0.0
        %576 = vmatprep.subr.mxu0 0.0
        %577 = vmatpush1.msra.mxu0 0.0
        %578 = vmatprep.subr.mxu0 0.0
        %579 = vmatpush1.msra.mxu0 0.0
        %580 = vmatprep.subr.mxu0 0.0
        %581 = vmatpush1.msra.mxu0 0.0
        %582 = vmatprep.subr.mxu0 0.0
        %583 = vmatpush1.msra.mxu0 0.0
        %584 = vmatprep.subr.mxu0 0.0
        %585 = vmatpush1.msra.mxu0 0.0
        %586 = vmatprep.subr.mxu0 0.0
        %587 = vmatpush1.msra.mxu0 0.0
        %588 = vmatprep.mubr.f32.mxu0 0.0
        %589 = vmatmul.mubr.f32.gmra.mrb[0].mxu0 %v333
        %v590 = vpop.f32.mrb[0].mxu0
        %v591 = vadd.f32 0.0, %v590
        %v592 = vpop.f32.mrb[0].mxu0
        %v593 = vadd.f32 0.0, %v592
        %594 = vmatprep.mubr.f32.mxu0 0.0
        %595 = vmatmul.mubr.f32.gmra.mrb[0].mxu0 %v336
        %v596 = vpop.f32.mrb[0].mxu0
        %v597 = vadd.f32 0.0, %v596
        %v598 = vpop.f32.mrb[0].mxu0
        %v599 = vadd.f32 0.0, %v598
        %600 = vdwg.mxu0
        %601 = vmatprep.subr.mxu0 %v495
        %602 = vmatpush1.msra.mxu0 %v494
        %603 = vmatprep.subr.mxu0 %v499
        %604 = vmatpush1.msra.mxu0 %v498
        %605 = vmatprep.subr.mxu0 %v503
        %606 = vmatpush1.msra.mxu0 %v502
        %607 = vmatprep.subr.mxu0 %v507
        %608 = vmatpush1.msra.mxu0 %v506
        %609 = vmatprep.subr.mxu0 %v511
        %610 = vmatpush1.msra.mxu0 %v510
        %611 = vmatprep.subr.mxu0 %v515
        %612 = vmatpush1.msra.mxu0 %v514
        %613 = vmatprep.subr.mxu0 %v519
        %614 = vmatpush1.msra.mxu0 %v518
        %615 = vmatprep.subr.mxu0 %v523
        %616 = vmatpush1.msra.mxu0 %v522
        %617 = vmatprep.subr.mxu0 0.0
        %618 = vmatpush1.msra.mxu0 0.0
        %619 = vmatprep.subr.mxu0 0.0
        %620 = vmatpush1.msra.mxu0 0.0
        %621 = vmatprep.subr.mxu0 0.0
        %622 = vmatpush1.msra.mxu0 0.0
        %623 = vmatprep.subr.mxu0 0.0
        %624 = vmatpush1.msra.mxu0 0.0
        %625 = vmatprep.subr.mxu0 0.0
        %626 = vmatpush1.msra.mxu0 0.0
        %627 = vmatprep.subr.mxu0 0.0
        %628 = vmatpush1.msra.mxu0 0.0
        %629 = vmatprep.subr.mxu0 0.0
        %630 = vmatpush1.msra.mxu0 0.0
        %631 = vmatprep.subr.mxu0 0.0
        %632 = vmatpush1.msra.mxu0 0.0
        %633 = vmatprep.subr.mxu0 0.0
        %634 = vmatpush1.msra.mxu0 0.0
        %635 = vmatprep.subr.mxu0 0.0
        %636 = vmatpush1.msra.mxu0 0.0
        %637 = vmatprep.subr.mxu0 0.0
        %638 = vmatpush1.msra.mxu0 0.0
        %639 = vmatprep.subr.mxu0 0.0
        %640 = vmatpush1.msra.mxu0 0.0
        %641 = vmatprep.subr.mxu0 0.0
        %642 = vmatpush1.msra.mxu0 0.0
        %643 = vmatprep.subr.mxu0 0.0
        %644 = vmatpush1.msra.mxu0 0.0
        %645 = vmatprep.subr.mxu0 0.0
        %646 = vmatpush1.msra.mxu0 0.0
        %647 = vmatprep.subr.mxu0 0.0
        %648 = vmatpush1.msra.mxu0 0.0
        %649 = vmatprep.subr.mxu0 0.0
        %650 = vmatpush1.msra.mxu0 0.0
        %651 = vmatprep.subr.mxu0 0.0
        %652 = vmatpush1.msra.mxu0 0.0
        %653 = vmatprep.subr.mxu0 0.0
        %654 = vmatpush1.msra.mxu0 0.0
        %655 = vmatprep.subr.mxu0 0.0
        %656 = vmatpush1.msra.mxu0 0.0
        %657 = vmatprep.subr.mxu0 0.0
        %658 = vmatpush1.msra.mxu0 0.0
        %659 = vmatprep.subr.mxu0 0.0
        %660 = vmatpush1.msra.mxu0 0.0
        %661 = vmatprep.subr.mxu0 0.0
        %662 = vmatpush1.msra.mxu0 0.0
        %663 = vmatprep.subr.mxu0 0.0
        %664 = vmatpush1.msra.mxu0 0.0
        %665 = vmatprep.mubr.f32.mxu0 0.0
        %666 = vmatmul.mubr.f32.gmra.mrb[0].mxu0 %v333
        %v667 = vpop.f32.mrb[0].mxu0
        %v668 = vadd.f32 0.0, %v667
        %v669 = vpop.f32.mrb[0].mxu0
        %v670 = vadd.f32 0.0, %v669
        %671 = vmatprep.mubr.f32.mxu0 0.0
        %672 = vmatmul.mubr.f32.gmra.mrb[0].mxu0 %v336
        %v673 = vpop.f32.mrb[0].mxu0
        %v674 = vadd.f32 0.0, %v673
        %v675 = vpop.f32.mrb[0].mxu0
        %v676 = vadd.f32 0.0, %v675
        %677 = vdwg.mxu0
        %v678 = vxor.u32 %v405, 2147483648
        %v679 = vxor.u32 %v407, 2147483648
        %v680 = vxor.u32 %v482, 2147483648
        %v681 = vxor.u32 %v484, 2147483648
        %v682 = vxor.u32 %v411, 2147483648
        %v683 = vxor.u32 %v413, 2147483648
        %v684 = vxor.u32 %v488, 2147483648
        %v685 = vxor.u32 %v490, 2147483648
        %v686 = vmul.f32 %v678, 1.442695
        %v687 = vpow.pop %v686
        %v688 = vmul.f32 %v679, 1.442695
        %v689 = vpow.pop %v688
        %v690 = vmul.f32 %v680, 1.442695
        %v691 = vpow.pop %v690
        %v692 = vmul.f32 %v681, 1.442695
        %v693 = vpow.pop %v692
        %v694 = vmul.f32 %v682, 1.442695
        %v695 = vpow.pop %v694
        %v696 = vmul.f32 %v683, 1.442695
        %v697 = vpow.pop %v696
        %v698 = vmul.f32 %v684, 1.442695
        %v699 = vpow.pop %v698
        %v700 = vmul.f32 %v685, 1.442695
        %v701 = vpow.pop %v700
        %v702 = vadd.f32 %v687, 1.0
        %v703 = vadd.f32 %v689, 1.0
        %v704 = vadd.f32 %v691, 1.0
        %v705 = vadd.f32 %v693, 1.0
        %v706 = vadd.f32 %v695, 1.0
        %v707 = vadd.f32 %v697, 1.0
        %v708 = vadd.f32 %v699, 1.0
        %v709 = vadd.f32 %v701, 1.0
        %v710 = vrcp.pop %v702
        %v711 = vmul.f32 1.0, %v710
        %v712 = vrcp.pop %v703
        %v713 = vmul.f32 1.0, %v712
        %v714 = vrcp.pop %v704
        %v715 = vmul.f32 1.0, %v714
        %v716 = vrcp.pop %v705
        %v717 = vmul.f32 1.0, %v716
        %v718 = vrcp.pop %v706
        %v719 = vmul.f32 1.0, %v718
        %v720 = vrcp.pop %v707
        %v721 = vmul.f32 1.0, %v720
        %v722 = vrcp.pop %v708
        %v723 = vmul.f32 1.0, %v722
        %v724 = vrcp.pop %v709
        %v725 = vmul.f32 1.0, %v724
        %v726 = vmul.f32 %v405, %v711
        %v727 = vmul.f32 %v407, %v713
        %v728 = vmul.f32 %v482, %v715
        %v729 = vmul.f32 %v484, %v717
        %v730 = vmul.f32 %v411, %v719
        %v731 = vmul.f32 %v413, %v721
        %v732 = vmul.f32 %v488, %v723
        %v733 = vmul.f32 %v490, %v725
        %v734 = vmul.f32 %v726, %v591
        %v735 = vmul.f32 %v727, %v593
        %v736 = vmul.f32 %v728, %v668
        %v737 = vmul.f32 %v729, %v670
        %v738 = vmul.f32 %v730, %v597
        %v739 = vmul.f32 %v731, %v599
        %v740 = vmul.f32 %v732, %v674
        %v741 = vmul.f32 %v733, %v676
        %v742 = vld [vmem:[%s288] sm:$0xff]
        %v743 = vld [vmem:[%s288 + $0x8] sm:$0xff]
        %745 = vset.pattern.permute.xlu0 0
        %746 = vperm.xlu0 %745, %v742
        %v747 = vpop.permute.xlu0 %746
        %750 = vset.pattern.permute.xlu0 0
        %751 = vperm.xlu0 %750, %v743
        %v752 = vpop.permute.xlu0 %751
        %v754 = vmul.f32 %v734, %v747
        %v755 = vmul.f32 %v738, %v752
        %756 = vset.pattern.permute.xlu0 1
        %757 = vperm.xlu0 %756, %v742
        %v758 = vpop.permute.xlu0 %757
        %760 = vset.pattern.permute.xlu0 1
        %761 = vperm.xlu0 %760, %v743
        %v762 = vpop.permute.xlu0 %761
        %v764 = vmul.f32 %v735, %v758
        %v765 = vmul.f32 %v739, %v762
        %766 = vset.pattern.permute.xlu0 2
        %767 = vperm.xlu0 %766, %v742
        %v768 = vpop.permute.xlu0 %767
        %770 = vset.pattern.permute.xlu0 2
        %771 = vperm.xlu0 %770, %v743
        %v772 = vpop.permute.xlu0 %771
        %v774 = vmul.f32 %v736, %v768
        %v775 = vmul.f32 %v740, %v772
        %776 = vset.pattern.permute.xlu0 3
        %777 = vperm.xlu0 %776, %v742
        %v778 = vpop.permute.xlu0 %777
        %780 = vset.pattern.permute.xlu0 3
        %781 = vperm.xlu0 %780, %v743
        %v782 = vpop.permute.xlu0 %781
        %v784 = vmul.f32 %v737, %v778
        %v785 = vmul.f32 %v741, %v782
        %v786 = vld [vmem:[%s4] sm:$0xff]
        %v787 = vld [vmem:[%s4 + $0x8] sm:$0xff]
        %v788 = vld [vmem:[%s4 + $0x10] sm:$0xff]
        %v789 = vld [vmem:[%s4 + $0x18] sm:$0xff]
        %v790 = vld [vmem:[%s4 + $0x20] sm:$0xff]
        %v791 = vld [vmem:[%s4 + $0x28] sm:$0xff]
        %v792 = vld [vmem:[%s4 + $0x30] sm:$0xff]
        %v793 = vld [vmem:[%s4 + $0x38] sm:$0xff]
        %v794 = vld [vmem:[%s4 + $0x40] sm:$0xff]
        %v795 = vld [vmem:[%s4 + $0x48] sm:$0xff]
        %v796 = vld [vmem:[%s4 + $0x50] sm:$0xff]
        %v797 = vld [vmem:[%s4 + $0x58] sm:$0xff]
        %v798 = vld [vmem:[%s4 + $0x60] sm:$0xff]
        %v799 = vld [vmem:[%s4 + $0x68] sm:$0xff]
        %v800 = vld [vmem:[%s4 + $0x70] sm:$0xff]
        %v801 = vld [vmem:[%s4 + $0x78] sm:$0xff]
        %v802 = vld [vmem:[%s4 + $0x80] sm:$0xff]
        %v803 = vld [vmem:[%s4 + $0x88] sm:$0xff]
        %v804 = vld [vmem:[%s4 + $0x90] sm:$0xff]
        %v805 = vld [vmem:[%s4 + $0x98] sm:$0xff]
        %v806 = vld [vmem:[%s4 + $0xa0] sm:$0xff]
        %v807 = vld [vmem:[%s4 + $0xa8] sm:$0xff]
        %v808 = vld [vmem:[%s4 + $0xb0] sm:$0xff]
        %v809 = vld [vmem:[%s4 + $0xb8] sm:$0xff]
        %v810 = vld [vmem:[%s4 + $0xc0] sm:$0xff]
        %v811 = vld [vmem:[%s4 + $0xc8] sm:$0xff]
        %v812 = vld [vmem:[%s4 + $0xd0] sm:$0xff]
        %v813 = vld [vmem:[%s4 + $0xd8] sm:$0xff]
        %v814 = vld [vmem:[%s4 + $0xe0] sm:$0xff]
        %v815 = vld [vmem:[%s4 + $0xe8] sm:$0xff]
        %v816 = vld [vmem:[%s4 + $0xf0] sm:$0xff]
        %v817 = vld [vmem:[%s4 + $0xf8] sm:$0xff]
        %v818 = vld [vmem:[%s4 + $0x100] sm:$0xff]
        %v819 = vld [vmem:[%s4 + $0x108] sm:$0xff]
        %v820 = vld [vmem:[%s4 + $0x110] sm:$0xff]
        %v821 = vld [vmem:[%s4 + $0x118] sm:$0xff]
        %v822 = vld [vmem:[%s4 + $0x120] sm:$0xff]
        %v823 = vld [vmem:[%s4 + $0x128] sm:$0xff]
        %v824 = vld [vmem:[%s4 + $0x130] sm:$0xff]
        %v825 = vld [vmem:[%s4 + $0x138] sm:$0xff]
        %v826 = vld [vmem:[%s4 + $0x140] sm:$0xff]
        %v827 = vld [vmem:[%s4 + $0x148] sm:$0xff]
        %v828 = vld [vmem:[%s4 + $0x150] sm:$0xff]
        %v829 = vld [vmem:[%s4 + $0x158] sm:$0xff]
        %v830 = vld [vmem:[%s4 + $0x160] sm:$0xff]
        %v831 = vld [vmem:[%s4 + $0x168] sm:$0xff]
        %v832 = vld [vmem:[%s4 + $0x170] sm:$0xff]
        %v833 = vld [vmem:[%s4 + $0x178] sm:$0xff]
        %v834 = vld [vmem:[%s4 + $0x180] sm:$0xff]
        %v835 = vld [vmem:[%s4 + $0x188] sm:$0xff]
        %v836 = vld [vmem:[%s4 + $0x190] sm:$0xff]
        %v837 = vld [vmem:[%s4 + $0x198] sm:$0xff]
        %v838 = vld [vmem:[%s4 + $0x1a0] sm:$0xff]
        %v839 = vld [vmem:[%s4 + $0x1a8] sm:$0xff]
        %v840 = vld [vmem:[%s4 + $0x1b0] sm:$0xff]
        %v841 = vld [vmem:[%s4 + $0x1b8] sm:$0xff]
        %v842 = vld [vmem:[%s4 + $0x1c0] sm:$0xff]
        %v843 = vld [vmem:[%s4 + $0x1c8] sm:$0xff]
        %v844 = vld [vmem:[%s4 + $0x1d0] sm:$0xff]
        %v845 = vld [vmem:[%s4 + $0x1d8] sm:$0xff]
        %v846 = vld [vmem:[%s4 + $0x1e0] sm:$0xff]
        %v847 = vld [vmem:[%s4 + $0x1e8] sm:$0xff]
        %v848 = vld [vmem:[%s4 + $0x1f0] sm:$0xff]
        %v849 = vld [vmem:[%s4 + $0x1f8] sm:$0xff]
        %850 = vmatprep.subr.mxu0 0.0
        %851 = vmatpush1.msra.mxu0 %v786
        %852 = vmatprep.subr.mxu0 0.0
        %853 = vmatpush1.msra.mxu0 %v787
        %854 = vmatprep.subr.mxu0 0.0
        %855 = vmatpush1.msra.mxu0 %v788
        %856 = vmatprep.subr.mxu0 0.0
        %857 = vmatpush1.msra.mxu0 %v789
        %858 = vmatprep.subr.mxu0 0.0
        %859 = vmatpush1.msra.mxu0 %v790
        %860 = vmatprep.subr.mxu0 0.0
        %861 = vmatpush1.msra.mxu0 %v791
        %862 = vmatprep.subr.mxu0 0.0
        %863 = vmatpush1.msra.mxu0 %v792
        %864 = vmatprep.subr.mxu0 0.0
        %865 = vmatpush1.msra.mxu0 %v793
        %866 = vmatprep.subr.mxu0 0.0
        %867 = vmatpush1.msra.mxu0 %v794
        %868 = vmatprep.subr.mxu0 0.0
        %869 = vmatpush1.msra.mxu0 %v795
        %870 = vmatprep.subr.mxu0 0.0
        %871 = vmatpush1.msra.mxu0 %v796
        %872 = vmatprep.subr.mxu0 0.0
        %873 = vmatpush1.msra.mxu0 %v797
        %874 = vmatprep.subr.mxu0 0.0
        %875 = vmatpush1.msra.mxu0 %v798
        %876 = vmatprep.subr.mxu0 0.0
        %877 = vmatpush1.msra.mxu0 %v799
        %878 = vmatprep.subr.mxu0 0.0
        %879 = vmatpush1.msra.mxu0 %v800
        %880 = vmatprep.subr.mxu0 0.0
        %881 = vmatpush1.msra.mxu0 %v801
        %882 = vmatprep.subr.mxu0 0.0
        %883 = vmatpush1.msra.mxu0 %v802
        %884 = vmatprep.subr.mxu0 0.0
        %885 = vmatpush1.msra.mxu0 %v803
        %886 = vmatprep.subr.mxu0 0.0
        %887 = vmatpush1.msra.mxu0 %v804
        %888 = vmatprep.subr.mxu0 0.0
        %889 = vmatpush1.msra.mxu0 %v805
        %890 = vmatprep.subr.mxu0 0.0
        %891 = vmatpush1.msra.mxu0 %v806
        %892 = vmatprep.subr.mxu0 0.0
        %893 = vmatpush1.msra.mxu0 %v807
        %894 = vmatprep.subr.mxu0 0.0
        %895 = vmatpush1.msra.mxu0 %v808
        %896 = vmatprep.subr.mxu0 0.0
        %897 = vmatpush1.msra.mxu0 %v809
        %898 = vmatprep.subr.mxu0 0.0
        %899 = vmatpush1.msra.mxu0 %v810
        %900 = vmatprep.subr.mxu0 0.0
        %901 = vmatpush1.msra.mxu0 %v811
        %902 = vmatprep.subr.mxu0 0.0
        %903 = vmatpush1.msra.mxu0 %v812
        %904 = vmatprep.subr.mxu0 0.0
        %905 = vmatpush1.msra.mxu0 %v813
        %906 = vmatprep.subr.mxu0 0.0
        %907 = vmatpush1.msra.mxu0 %v814
        %908 = vmatprep.subr.mxu0 0.0
        %909 = vmatpush1.msra.mxu0 %v815
        %910 = vmatprep.subr.mxu0 0.0
        %911 = vmatpush1.msra.mxu0 %v816
        %912 = vmatprep.subr.mxu0 0.0
        %913 = vmatpush1.msra.mxu0 %v817
        %914 = vmatprep.mubr.f32.mxu0 %v764
        %915 = vmatmul.mubr.f32.gmra.mrb[0].mxu0 %v754
        %v916 = vpop.f32.mrb[0].mxu0
        %v917 = vadd.f32 0.0, %v916
        %v918 = vpop.f32.mrb[0].mxu0
        %919 = vmatprep.mubr.f32.mxu0 %v765
        %920 = vmatmul.mubr.f32.gmra.mrb[0].mxu0 %v755
        %v921 = vpop.f32.mrb[0].mxu0
        %v922 = vadd.f32 0.0, %v921
        %v923 = vpop.f32.mrb[0].mxu0
        %924 = vdwg.mxu0
        %925 = vmatprep.subr.mxu0 0.0
        %926 = vmatpush1.msra.mxu0 %v818
        %927 = vmatprep.subr.mxu0 0.0
        %928 = vmatpush1.msra.mxu0 %v819
        %929 = vmatprep.subr.mxu0 0.0
        %930 = vmatpush1.msra.mxu0 %v820
        %931 = vmatprep.subr.mxu0 0.0
        %932 = vmatpush1.msra.mxu0 %v821
        %933 = vmatprep.subr.mxu0 0.0
        %934 = vmatpush1.msra.mxu0 %v822
        %935 = vmatprep.subr.mxu0 0.0
        %936 = vmatpush1.msra.mxu0 %v823
        %937 = vmatprep.subr.mxu0 0.0
        %938 = vmatpush1.msra.mxu0 %v824
        %939 = vmatprep.subr.mxu0 0.0
        %940 = vmatpush1.msra.mxu0 %v825
        %941 = vmatprep.subr.mxu0 0.0
        %942 = vmatpush1.msra.mxu0 %v826
        %943 = vmatprep.subr.mxu0 0.0
        %944 = vmatpush1.msra.mxu0 %v827
        %945 = vmatprep.subr.mxu0 0.0
        %946 = vmatpush1.msra.mxu0 %v828
        %947 = vmatprep.subr.mxu0 0.0
        %948 = vmatpush1.msra.mxu0 %v829
        %949 = vmatprep.subr.mxu0 0.0
        %950 = vmatpush1.msra.mxu0 %v830
        %951 = vmatprep.subr.mxu0 0.0
        %952 = vmatpush1.msra.mxu0 %v831
        %953 = vmatprep.subr.mxu0 0.0
        %954 = vmatpush1.msra.mxu0 %v832
        %955 = vmatprep.subr.mxu0 0.0
        %956 = vmatpush1.msra.mxu0 %v833
        %957 = vmatprep.subr.mxu0 0.0
        %958 = vmatpush1.msra.mxu0 %v834
        %959 = vmatprep.subr.mxu0 0.0
        %960 = vmatpush1.msra.mxu0 %v835
        %961 = vmatprep.subr.mxu0 0.0
        %962 = vmatpush1.msra.mxu0 %v836
        %963 = vmatprep.subr.mxu0 0.0
        %964 = vmatpush1.msra.mxu0 %v837
        %965 = vmatprep.subr.mxu0 0.0
        %966 = vmatpush1.msra.mxu0 %v838
        %967 = vmatprep.subr.mxu0 0.0
        %968 = vmatpush1.msra.mxu0 %v839
        %969 = vmatprep.subr.mxu0 0.0
        %970 = vmatpush1.msra.mxu0 %v840
        %971 = vmatprep.subr.mxu0 0.0
        %972 = vmatpush1.msra.mxu0 %v841
        %973 = vmatprep.subr.mxu0 0.0
        %974 = vmatpush1.msra.mxu0 %v842
        %975 = vmatprep.subr.mxu0 0.0
        %976 = vmatpush1.msra.mxu0 %v843
        %977 = vmatprep.subr.mxu0 0.0
        %978 = vmatpush1.msra.mxu0 %v844
        %979 = vmatprep.subr.mxu0 0.0
        %980 = vmatpush1.msra.mxu0 %v845
        %981 = vmatprep.subr.mxu0 0.0
        %982 = vmatpush1.msra.mxu0 %v846
        %983 = vmatprep.subr.mxu0 0.0
        %984 = vmatpush1.msra.mxu0 %v847
        %985 = vmatprep.subr.mxu0 0.0
        %986 = vmatpush1.msra.mxu0 %v848
        %987 = vmatprep.subr.mxu0 0.0
        %988 = vmatpush1.msra.mxu0 %v849
        %989 = vmatprep.mubr.f32.mxu0 %v784
        %990 = vmatmul.mubr.f32.gmra.mrb[0].mxu0 %v774
        %v991 = vpop.f32.mrb[0].mxu0
        %v992 = vadd.f32 %v917, %v991
        %v993 = vpop.f32.mrb[0].mxu0
        %994 = vmatprep.mubr.f32.mxu0 %v785
        %995 = vmatmul.mubr.f32.gmra.mrb[0].mxu0 %v775
        %v996 = vpop.f32.mrb[0].mxu0
        %v997 = vadd.f32 %v922, %v996
        %v998 = vpop.f32.mrb[0].mxu0
        %999 = vdwg.mxu0
        %v1000 = vld [vmem:[%s294] sm:$0xff]
        %v1001 = vld [vmem:[%s294 + $0x8] sm:$0xff]
        %v1002 = vadd.f32 %v1000, %v992
        %v1003 = vadd.f32 %v1001, %v997
        %1004 = vst.msk [vmem:[%s277] sm:$0xff] %vm331, %v1002
        %1005 = vst.msk [vmem:[%s277 + $0x8] sm:$0xff] %vm331, %v1003
        %s1006 = sand.u32 %s169, 1
        %s1007 = scalar_lea.sflag [#allocation3], %s1006
        %s1008 = sand.u32 %s169, 1
        %s1009 = smul.addr %s1008, 16
        %s1010 = scalar_lea.vmem [#allocation2], %s1009
        // Predicated region
        $region45: #{anemone_attention_decoder_layer.5} parent=43 // pred_check
          %p1011 = pneg %p179
        $region46: #{anemone_attention_decoder_layer.5} parent=43 // pred_check_branch
          %1013 = sbr.rel (%p1011) target = $region48
        $region47: #{anemone_attention_decoder_layer.5} parent=43 // pred_region
          %s1014 = smul.u32 2, %s20
          %s1016 = ssub.s32 256, 256
          %1017 = vsyncadd %s1007, %s1016
          %s1018 = smul.addr %s1014, 128
          %s1019 = scalar_lea.hbm %s6, %s1018
          %s1020 = sshll.u32 %s1010, 4
          %s1021 = int_to_ptr.vmem [resolvable:$true] %s1020
          %1026 = dma.vmem_to_hbm [thread:$0]  %s1021, 256, %s1019, %s1007, 128, 128, 8
        $region48: #{anemone_attention_decoder_layer.5} parent=43 // pred_fallthru
          _
      $region44: #{anemone_attention_decoder_layer.5} parent=5 // pred_fallthru
        _
      %p1027 = scmp.le.s32.totalorder 2, %s15
      // Predicated region
      $region49: #{anemone_attention_decoder_layer.5} parent=5 // pred_check
        %p1028 = pneg %p1027
      $region50: #{anemone_attention_decoder_layer.5} parent=5 // pred_check_branch
        %1030 = sbr.rel (%p1028) target = $region52
      $region51: #{anemone_attention_decoder_layer.5} parent=5 // pred_region
        %s1031 = ssub.s32 %s15, 2
        // Predicated region
        $region53: #{anemone_attention_decoder_layer.5} parent=51 // pred_check
          %p1032 = pneg %p185
        $region54: #{anemone_attention_decoder_layer.5} parent=51 // pred_check_branch
          %1034 = sbr.rel (%p1032) target = $region56
        $region55: #{anemone_attention_decoder_layer.5} parent=51 // pred_region
          %s1035 = sand.u32 %s170, 1
          %s1036 = scalar_lea.sflag [#allocation3], %s1035
          %s1037 = sand.u32 %s170, 1
          %s1038 = smul.addr %s1037, 16
          %s1039 = scalar_lea.vmem [#allocation2], %s1038
          %1040 = dma.done %s1036, 256
        $region56: #{anemone_attention_decoder_layer.5} parent=51 // pred_fallthru
          _
      $region52: #{anemone_attention_decoder_layer.5} parent=5 // pred_fallthru
        _
    $region6: #{anemone_attention_decoder_layer.5} parent=1 // loop_footer
      %s19 = sadd.s32 1, %s15
    $region7: #{anemone_attention_decoder_layer.5} parent=1 // loop_footer_branch
      %14 = sbr.rel target = $region3
    $region8: #{anemone_attention_decoder_layer.5} parent=1 // loop_exit
      _
    %1041 = vsyncpa [#allocation3], 1
    %s1042 = scalar_lea.sflag [#allocation3], 1
    %1043 = vsyncpa %s1042, 1

</llo_original>
